<compile_context>
chip_gen: v7x
topology: tpu7x:2x2x1
jax: 0.10.0
libtpu: 0.0.40
codegen_flags: <defaults>
</compile_context>

<pallas_src>
import math

import jax
import jax.numpy as jnp
from jax import lax
from jax.experimental import pallas as pl
from jax.experimental.pallas import tpu as pltpu


def _round_up(x, m):
    return ((x + m - 1) // m) * m


# ----------------------------- Pallas kernel ------------------------------ #
def _stft_mag_kernel(blocks_ref, w_ref, o_ref):
    """One (n_freq, TF) output tile, frames on the lane dim.

    blocks_ref : (n_blocks, hop)  hop-blocked reflect-padded audio (resident)
    w_ref      : (2*NFP, win)     fused basis; rows [0, NFP) = window*cos(k,n),
                                  rows [NFP, 2*NFP) = window*sin(k,n)
                                  (rows beyond the n_freq real bins are zero)
    o_ref      : (n_freq, TF)     |STFT| tile  (n_freq = n_fft//2 + 1)
    """
    n_freq, tf = o_ref.shape
    hop = blocks_ref.shape[-1]
    nfp2, win = w_ref.shape
    nfp = nfp2 // 2
    n_sub = win // hop                        # shifted sub-matmuls per frame
    ext_rows = tf + _round_up(n_sub - 1, 8)   # aligned slab covering all shifts

    t = pl.program_id(1)
    f0 = pl.multiple_of(t * tf, 8)
    # One sublane-aligned slab load per tile; the per-shift sub-frames are
    # static slices of this value (no unaligned dynamic VMEM indexing).
    ext = blocks_ref[pl.ds(f0, ext_rows), :]             # (tf + pad, hop)
    w = w_ref[...]                                       # (2*NFP, win)

    contract = (((1,), (1,)), ((), ()))                  # A @ B^T on the MXU
    acc = jnp.zeros((nfp2, tf), jnp.float32)
    for j in range(n_sub):                               # static unroll (win/hop)
        slab = ext[j:j + tf, :]                          # (tf, hop) shifted view
        acc = acc + lax.dot_general(
            w[:, j * hop:(j + 1) * hop], slab, contract,
            preferred_element_type=jnp.float32)
    # TODO(synk): on v5e fuse pairs of hop blocks (K=128) to fill its 128x128 MXU.
    re = acc[:nfp, :]
    im = acc[nfp:, :]
    mag = jnp.sqrt(re * re + im * im + 1e-6)             # (NFP, tf)
    o_ref[...] = mag[:n_freq, :]


def _stft_mag(blocks, basis, *, n_freq, tf, n_frames_pad):
    """blocks: (B, n_blocks, hop) f32, basis: (2*NFP, win) f32
       -> (B, n_freq, n_frames_pad) f32 in final (freq, frames) orientation."""
    B, n_blocks, hop = blocks.shape
    nfp2, win = basis.shape
    n_tiles = n_frames_pad // tf
    return pl.pallas_call(
        _stft_mag_kernel,
        out_shape=jax.ShapeDtypeStruct((B, n_freq, n_frames_pad), jnp.float32),
        grid_spec=pltpu.PrefetchScalarGridSpec(
            num_scalar_prefetch=0,
            grid=(B, n_tiles),
            in_specs=[
                # Whole hop-blocked audio row, resident per batch (fetched once
                # per b since the block index is constant across the tile axis).
                pl.BlockSpec((None, n_blocks, hop), lambda b, t: (b, 0, 0)),
                # Fused windowed-DFT basis, resident across the whole grid.
                pl.BlockSpec((nfp2, win), lambda b, t: (0, 0)),
            ],
            out_specs=pl.BlockSpec((None, n_freq, tf), lambda b, t: (b, 0, t)),
        ),
        compiler_params=pltpu.CompilerParams(
            dimension_semantics=("parallel", "parallel"),
            vmem_limit_bytes=32 * 1024 * 1024,
        ),
    )(blocks, basis)


# ------------------------------ Module glue -------------------------------- #
class LinearSpectrogram:
    def __init__(self, n_fft=256, win_length=256, hop_length=64, center=False,
                 mode="pow2_sqrt"):
        assert not center, "module is used with center=False"
        assert mode == "pow2_sqrt"
        assert win_length == n_fft, "kernel assumes win_length == n_fft"
        assert win_length % hop_length == 0, "kernel assumes hop divides win"
        self.n_fft = n_fft
        self.win_length = win_length
        self.hop_length = hop_length
        self.n_freq = n_fft // 2 + 1
        self.nfp = _round_up(self.n_freq, 8)

        # Hann window (torch.hann_window default: periodic).
        n = jnp.arange(win_length, dtype=jnp.float32)
        window = 0.5 - 0.5 * jnp.cos(2.0 * math.pi * n / win_length)

        # Fused windowed one-sided DFT basis, frequency-major:
        #   rows [0, NFP)      : window * cos(2*pi*k*n/n_fft), k = 0..n_freq-1
        #   rows [NFP, 2*NFP)  : window * sin(2*pi*k*n/n_fft)  (zero at k=0 and
        #                        k=n_fft/2 by construction; sign irrelevant for |.|)
        # Rows past n_freq are zero padding to a multiple of 8 sublanes.
        k = jnp.arange(self.nfp, dtype=jnp.float32)
        ang = 2.0 * math.pi * jnp.outer(k, n) / n_fft              # (NFP, win)
        valid = (jnp.arange(self.nfp) < self.n_freq)[:, None]
        cos_b = jnp.where(valid, jnp.cos(ang), 0.0) * window[None, :]
        sin_b = jnp.where(valid, jnp.sin(ang), 0.0) * window[None, :]
        self.basis = jnp.concatenate([cos_b, sin_b], axis=0).astype(jnp.float32)

    def __call__(self, y):
        if y.ndim == 3:
            y = jnp.squeeze(y, axis=1)
        y = y.astype(jnp.float32)
        B, T = y.shape

        # Reflect pad (matches F.pad(..., mode='reflect') on the time axis).
        left = (self.win_length - self.hop_length) // 2
        right = (self.win_length - self.hop_length + 1) // 2
        y = jnp.pad(y, ((0, 0), (left, right)), mode="reflect")
        tp = y.shape[1]

        hop = self.hop_length
        n_frames = 1 + (tp - self.n_fft) // hop
        n_sub = self.win_length // hop
        ext_extra = _round_up(n_sub - 1, 8)

        # Frame-tile (lane) size: one tile for small inputs, otherwise balanced
        # 128-multiple tiles capped at 512 frames.  No forced >=2 split — the
        # grid already has B * n_tiles steps for megacore sharding on v7x.
        if n_frames <= 512:
            tf = _round_up(n_frames, 8)
            n_frames_pad = tf
        else:
            n_tiles = -(-n_frames // 512)
            tf = _round_up(-(-n_frames // n_tiles), 128)
            n_frames_pad = tf * n_tiles

        # Hop-block the padded audio; it is read from HBM exactly once.
        # TODO(synk): for very long audio, chunk the resident hop-block slab
        # over an extra grid axis instead of keeping it whole in VMEM.
        n_blocks = max(n_frames_pad + ext_extra, -(-tp // hop))
        pad = n_blocks * hop - tp
        if pad:
            y = jnp.pad(y, ((0, 0), (0, pad)))
        blocks = y.reshape(B, n_blocks, hop)

        spec = _stft_mag(blocks, self.basis, n_freq=self.n_freq, tf=tf,
                         n_frames_pad=n_frames_pad)
        if n_frames_pad != n_frames:
            spec = spec[:, :, :n_frames]
        return spec                                   # (B, n_freq, n_frames)


# ------------------------------- Reference --------------------------------- #
def _reference(y, n_fft, win_length, hop_length):
    if y.ndim == 3:
        y = jnp.squeeze(y, axis=1)
    left = (win_length - hop_length) // 2
    right = (win_length - hop_length + 1) // 2
    y = jnp.pad(y.astype(jnp.float32), ((0, 0), (left, right)), mode="reflect")
    n = jnp.arange(win_length, dtype=jnp.float32)
    window = 0.5 - 0.5 * jnp.cos(2.0 * math.pi * n / win_length)
    tp = y.shape[1]
    n_frames = 1 + (tp - n_fft) // hop_length
    idx = (jnp.arange(n_frames)[:, None] * hop_length
           + jnp.arange(win_length)[None, :])
    frames = y[:, idx] * window[None, None, :]
    fft = jnp.fft.rfft(frames, n=n_fft, axis=-1)               # (B, F, n_freq)
    mag = jnp.sqrt(jnp.real(fft) ** 2 + jnp.imag(fft) ** 2 + 1e-6)
    return jnp.transpose(mag, (0, 2, 1))                        # (B, n_freq, F)


if __name__ == "__main__":
    key = jax.random.PRNGKey(0)
    B, T = 2, 1024
    y = jax.random.normal(key, (B, 1, T), dtype=jnp.float32)    # (B, 1, T) audio

    mod = LinearSpectrogram(n_fft=256, win_length=256, hop_length=64,
                            center=False, mode="pow2_sqrt")
    out = mod(y)
    out = jax.block_until_ready(out)

    ref = _reference(y, 256, 256, 64)
    assert out.shape == ref.shape, (out.shape, ref.shape)
    assert jnp.max(jnp.abs(out - ref)) < 1e-2, float(jnp.max(jnp.abs(out - ref)))

    print("KERNEL_OK")
</pallas_src>

<mosaic_0001>
module attributes {stable_mosaic.version = 11 : i64} {
  func.func @_stft_mag_kernel(%arg0: i32, %arg1: i32, %arg2: memref<1x24x64xf32, #tpu.memory_space<vmem>>, %arg3: memref<272x256xf32, #tpu.memory_space<vmem>>, %arg4: memref<1x129x16xf32, #tpu.memory_space<vmem>>) attributes {dimension_semantics = [#tpu.dimension_semantics<parallel>, #tpu.dimension_semantics<parallel>], iteration_bounds = array<i64: 2, 1>, scalar_prefetch = 0 : i64, scratch_operands = 0 : i64, tpu.core_type = #tpu.core_type<tc>, window_params = [{transform_indices = @transform_0, window_bounds = array<i64: 1, 24, 64>}, {pipeline_mode = #tpu.pipeline_mode<synchronous>, transform_indices = @transform_1, window_bounds = array<i64: 272, 256>}, {transform_indices = @transform_2, window_bounds = array<i64: 1, 129, 16>}]} {
    %c16_i32 = arith.constant 16 : i32
    %0 = arith.muli %arg1, %c16_i32 : i32
    %1 = tpu.assume_multiple %0, 8 : i32
    %c0 = arith.constant 0 : index
    %2 = arith.index_cast %1 : i32 to index
    %c0_0 = arith.constant 0 : index
    %3 = vector.load %arg2[%c0, %2, %c0_0] : memref<1x24x64xf32, #tpu.memory_space<vmem>>, vector<1x24x64xf32>
    %4 = vector.shape_cast %3 : vector<1x24x64xf32> to vector<24x64xf32>
    %c0_1 = arith.constant 0 : index
    %c0_2 = arith.constant 0 : index
    %5 = vector.load %arg3[%c0_1, %c0_2] : memref<272x256xf32, #tpu.memory_space<vmem>>, vector<272x256xf32>
    %cst = arith.constant 0.000000e+00 : f32
    %6 = vector.broadcast %cst : f32 to vector<272x16xf32>
    %7 = vector.extract_strided_slice %4 {offsets = [0, 0], sizes = [16, 64], strides = [1, 1]} : vector<24x64xf32> to vector<16x64xf32>
    %8 = vector.extract_strided_slice %5 {offsets = [0, 0], sizes = [272, 64], strides = [1, 1]} : vector<272x256xf32> to vector<272x64xf32>
    %cst_3 = arith.constant dense<0.000000e+00> : vector<272x16xf32>
    %9 = tpu.matmul %8, %7, %cst_3 {dimension_numbers = #tpu.dot_dimension_numbers<[1], [1], [0], [0], [0, 0, 1, 0], [], []>} : vector<272x64xf32>, vector<16x64xf32>, vector<272x16xf32> -> vector<272x16xf32>
    %10 = arith.addf %6, %9 : vector<272x16xf32>
    %11 = vector.extract_strided_slice %4 {offsets = [1, 0], sizes = [16, 64], strides = [1, 1]} : vector<24x64xf32> to vector<16x64xf32>
    %12 = vector.extract_strided_slice %5 {offsets = [0, 64], sizes = [272, 64], strides = [1, 1]} : vector<272x256xf32> to vector<272x64xf32>
    %cst_4 = arith.constant dense<0.000000e+00> : vector<272x16xf32>
    %13 = tpu.matmul %12, %11, %cst_4 {dimension_numbers = #tpu.dot_dimension_numbers<[1], [1], [0], [0], [0, 0, 1, 0], [], []>} : vector<272x64xf32>, vector<16x64xf32>, vector<272x16xf32> -> vector<272x16xf32>
    %14 = arith.addf %10, %13 : vector<272x16xf32>
    %15 = vector.extract_strided_slice %4 {offsets = [2, 0], sizes = [16, 64], strides = [1, 1]} : vector<24x64xf32> to vector<16x64xf32>
    %16 = vector.extract_strided_slice %5 {offsets = [0, 128], sizes = [272, 64], strides = [1, 1]} : vector<272x256xf32> to vector<272x64xf32>
    %cst_5 = arith.constant dense<0.000000e+00> : vector<272x16xf32>
    %17 = tpu.matmul %16, %15, %cst_5 {dimension_numbers = #tpu.dot_dimension_numbers<[1], [1], [0], [0], [0, 0, 1, 0], [], []>} : vector<272x64xf32>, vector<16x64xf32>, vector<272x16xf32> -> vector<272x16xf32>
    %18 = arith.addf %14, %17 : vector<272x16xf32>
    %19 = vector.extract_strided_slice %4 {offsets = [3, 0], sizes = [16, 64], strides = [1, 1]} : vector<24x64xf32> to vector<16x64xf32>
    %20 = vector.extract_strided_slice %5 {offsets = [0, 192], sizes = [272, 64], strides = [1, 1]} : vector<272x256xf32> to vector<272x64xf32>
    %cst_6 = arith.constant dense<0.000000e+00> : vector<272x16xf32>
    %21 = tpu.matmul %20, %19, %cst_6 {dimension_numbers = #tpu.dot_dimension_numbers<[1], [1], [0], [0], [0, 0, 1, 0], [], []>} : vector<272x64xf32>, vector<16x64xf32>, vector<272x16xf32> -> vector<272x16xf32>
    %22 = arith.addf %18, %21 : vector<272x16xf32>
    %23 = vector.extract_strided_slice %22 {offsets = [0, 0], sizes = [136, 16], strides = [1, 1]} : vector<272x16xf32> to vector<136x16xf32>
    %24 = vector.extract_strided_slice %22 {offsets = [136, 0], sizes = [136, 16], strides = [1, 1]} : vector<272x16xf32> to vector<136x16xf32>
    %25 = arith.mulf %23, %23 : vector<136x16xf32>
    %26 = arith.mulf %24, %24 : vector<136x16xf32>
    %27 = arith.addf %25, %26 : vector<136x16xf32>
    %cst_7 = arith.constant 9.99999997E-7 : f32
    %28 = vector.broadcast %cst_7 : f32 to vector<136x16xf32>
    %29 = arith.addf %27, %28 : vector<136x16xf32>
    %30 = math.sqrt %29 : vector<136x16xf32>
    %31 = vector.extract_strided_slice %30 {offsets = [0, 0], sizes = [129, 16], strides = [1, 1]} : vector<136x16xf32> to vector<129x16xf32>
    %c0_8 = arith.constant 0 : index
    %c0_9 = arith.constant 0 : index
    %c0_10 = arith.constant 0 : index
    %32 = vector.load %arg4[%c0_8, %c0_9, %c0_10] : memref<1x129x16xf32, #tpu.memory_space<vmem>>, vector<1x129x16xf32>
    %33 = vector.shape_cast %32 : vector<1x129x16xf32> to vector<129x16xf32>
    %34 = vector.shape_cast %31 : vector<129x16xf32> to vector<1x129x16xf32>
    tpu.vector_store %arg4[%c0_8, %c0_9, %c0_10], %34 {strides = array<i32>} : memref<1x129x16xf32, #tpu.memory_space<vmem>>, vector<1x129x16xf32>,
    return
  }
  func.func @transform_0(%arg0: i32, %arg1: i32) -> (i32, i32, i32) {
    %c0_i32 = arith.constant 0 : i32
    %c0_i32_0 = arith.constant 0 : i32
    %c0_i32_1 = arith.constant 0 : i32
    return %arg0, %c0_i32, %c0_i32_0 : i32, i32, i32
  }
  func.func @transform_1(%arg0: i32, %arg1: i32) -> (i32, i32) {
    %c0_i32 = arith.constant 0 : i32
    %c0_i32_0 = arith.constant 0 : i32
    %c0_i32_1 = arith.constant 0 : i32
    return %c0_i32, %c0_i32_0 : i32, i32
  }
  func.func @transform_2(%arg0: i32, %arg1: i32) -> (i32, i32, i32) {
    %c0_i32 = arith.constant 0 : i32
    %c0_i32_0 = arith.constant 0 : i32
    return %arg0, %c0_i32, %arg1 : i32, i32, i32
  }
}

</mosaic_0001>

<llo_original>
// kernel: tpu_custom_call.1
$region0: #{tpu_custom_call.1}
  #allocation0 [shape = 'u32[]', space=smem, size = 0x4, offset = 0x4, fixed_abs, tag = 'smem constant byte address 0x4 - core index']
  #allocation1 [shape = 'u32[144,128]{1,0:T(1,128)}', space=vmem, size = 0x12000, scoped, tag = 'internal scratch']
  %s0 = inlined_call_operand.hbm [shape: f32[2,24,64], index: 0, kind: input, shape index: {}]
  %s1 = inlined_call_operand.hbm [shape: f32[272,256], index: 1, kind: input, shape index: {}]
  %s2 = inlined_call_operand.vmem [shape: f32[2,129,16], index: 2, kind: output, shape index: {}]
  %s3 = sld [smem:[#allocation0]]
  $region49: #{tpu_custom_call.1} parent=0
    _
  %s5 = ssub.s32 1, %s3
  %s6 = scalar_select 0, %s5, %s3
  $region1: #{tpu_custom_call.1} parent=0
    #allocation2 [shape = 'u8[24576]{0}', space=vmem, size = 0x6000, scoped, tag = 'input window, operand 0']
    #allocation3 [shape = 's32[2]{0}', space=sflag, size = 0x8, scoped, tag = 'scoped memory for tpu_custom_call.1']
    #allocation4 [shape = 'u8[278528]{0}', space=vmem, size = 0x44000, scoped, tag = 'input window, operand 1, single buffered']
    #allocation5 [shape = 's32[1]{0}', space=sflag, size = 0x4, scoped, tag = 'scoped memory for tpu_custom_call.1']
    %7 = vsyncpa [#allocation3], 0
    %s8 = scalar_lea.sflag [#allocation3], 1
    %9 = vsyncpa %s8, 0
    %10 = vsyncpa [#allocation5], 0
    loop: start=0, step=1, limit=4
    $region2: #{tpu_custom_call.1} parent=1 // loop_pre_header
      _
    $region3: #{tpu_custom_call.1} parent=1 // loop_header
      %s12 = sphi 0, %s16
      %p13 = scmp.ge.s32.totalorder %s12, 4
      %s19 = sphi 0, %s31
      %s20 = sphi 0, %s27
      %s21 = sphi 0, %s19
      %s22 = sphi 0, %s20
      %s23 = sphi 0, %s21
      %s24 = sphi 0, %s22
      %s34 = sphi 0, %s36
      %s37 = sphi 0, %s34
      %s38 = sphi 0, %s37
      %s54 = sphi 0, %s38
      %s58 = sphi 0, %s58
      %s60 = sphi 0, %s58
      %s61 = sphi 0, %s60
      %s75 = sphi 0, %s61
      %s83 = sphi 0, %s85
      %s86 = sphi 0, %s83
      %s87 = sphi 0, %s86
      %s103 = sphi 0, %s87
    $region4: #{tpu_custom_call.1} parent=1 // loop_header_branch
      %15 = sbr.rel (%p13) target = $region8
    $region5: #{tpu_custom_call.1} parent=1 // loop_body
      %s17 = ssub.s32 %s12, 1
      %s18 = ssub.s32 %s12, 2
      %s25 = sadd.s32 1, %s20
      %p26 = scmp.ge.s32.totalorder %s25, 1
      %s27 = scalar_select %p26, 0, %s25
      %s28 = sadd.s32 1, %s19
      %s29 = scalar_select %p26, %s28, %s19
      %p30 = scmp.ge.s32.totalorder %s29, 2
      %s31 = scalar_select %p30, 0, %s29
      %s32 = ssub.s32 %s19, %s31
      %p33 = scmp.eq.s32.totalorder %s32, 0
      %s35 = sadd.s32 %s34, 1
      %s36 = scalar_select %p33, %s34, %s35
      %p39 = pneg %p33
      %p40 = scmp.eq.s32.totalorder %s12, 1
      %p41 = por %p39, %p40
      %p42 = scmp.ne.s32.totalorder %s34, %s37
      %p43 = scmp.eq.s32.totalorder %s12, 0
      %p44 = por %p42, %p43
      %p45 = scmp.ne.s32.totalorder %s34, %s37
      %p46 = scmp.eq.s32.totalorder %s17, 1
      %p47 = por %p45, %p46
      %p48 = scmp.ne.s32.totalorder %s37, %s38
      %p49 = scmp.eq.s32.totalorder %s17, 0
      %p50 = por %p48, %p49
      %p51 = scmp.ne.s32.totalorder %s37, %s38
      %p52 = scmp.eq.s32.totalorder %s18, 1
      %p53 = por %p51, %p52
      %p55 = scmp.ne.s32.totalorder %s38, %s54
      %p56 = scmp.eq.s32.totalorder %s18, 0
      %p57 = por %p55, %p56
      %s59 = sadd.s32 %s58, 1
      %p62 = scmp.eq.s32.totalorder %s12, 1
      %p63 = scmp.ne.s32.totalorder %s58, %s60
      %p64 = scmp.eq.s32.totalorder %s12, 0
      %p65 = por %p63, %p64
      %p66 = scmp.ne.s32.totalorder %s58, %s60
      %p67 = scmp.eq.s32.totalorder %s17, 1
      %p68 = por %p66, %p67
      %p69 = scmp.ne.s32.totalorder %s60, %s61
      %p70 = scmp.eq.s32.totalorder %s17, 0
      %p71 = por %p69, %p70
      %p72 = scmp.ne.s32.totalorder %s60, %s61
      %p73 = scmp.eq.s32.totalorder %s18, 1
      %p74 = por %p72, %p73
      %p76 = scmp.ne.s32.totalorder %s61, %s75
      %p77 = scmp.eq.s32.totalorder %s18, 0
      %p78 = por %p76, %p77
      %s79 = ssub.s32 %s19, %s31
      %s80 = ssub.s32 %s20, %s27
      %s81 = sor.u32 %s79, %s80
      %p82 = scmp.eq.s32.totalorder %s81, 0
      %s84 = sadd.s32 %s83, 1
      %s85 = scalar_select %p82, %s83, %s84
      %p88 = pneg %p82
      %p89 = scmp.eq.s32.totalorder %s12, 1
      %p90 = por %p88, %p89
      %p91 = scmp.ne.s32.totalorder %s83, %s86
      %p92 = scmp.eq.s32.totalorder %s12, 0
      %p93 = por %p91, %p92
      %p94 = scmp.ne.s32.totalorder %s83, %s86
      %p95 = scmp.eq.s32.totalorder %s17, 1
      %p96 = por %p94, %p95
      %p97 = scmp.ne.s32.totalorder %s86, %s87
      %p98 = scmp.eq.s32.totalorder %s17, 0
      %p99 = por %p97, %p98
      %p100 = scmp.ne.s32.totalorder %s86, %s87
      %p101 = scmp.eq.s32.totalorder %s18, 1
      %p102 = por %p100, %p101
      %p104 = scmp.ne.s32.totalorder %s87, %s103
      %p105 = scmp.eq.s32.totalorder %s18, 0
      %p106 = por %p104, %p105
      %p107 = scmp.le.s32.totalorder 1, %s12
      %p108 = scmp.lt.s32.totalorder %s12, 3
      %p109 = pnand %p107, %p108
      %p110 = pneg %p109
      // Predicated region
      $region9: #{tpu_custom_call.1} parent=5 // pred_check
        _
      $region10: #{tpu_custom_call.1} parent=5 // pred_check_branch
        %112 = sbr.rel (%p109) target = $region12
      $region11: #{tpu_custom_call.1} parent=5 // pred_region
        %s113 = ssub.s32 %s12, 1
        // Predicated region
        $region13: #{tpu_custom_call.1} parent=11 // pred_check
          %p114 = pneg %p71
        $region14: #{tpu_custom_call.1} parent=11 // pred_check_branch
          %116 = sbr.rel (%p114) target = $region16
        $region15: #{tpu_custom_call.1} parent=11 // pred_region
          %s118 = ssub.s32 8704, 8704
          %119 = vsyncadd [#allocation5], %s118
          %s120 = sshll.u32 [#allocation4], 4
          %s121 = int_to_ptr.vmem [resolvable:$true] %s120
          %126 = dma.hbm_to_vmem [thread:$0]  %s1, 8704, %s121, [#allocation5], 256, 256, 16
        $region16: #{tpu_custom_call.1} parent=11 // pred_fallthru
          _
      $region12: #{tpu_custom_call.1} parent=5 // pred_fallthru
        _
      %p127 = scmp.lt.s32.totalorder %s12, 2
      // Predicated region
      $region17: #{tpu_custom_call.1} parent=5 // pred_check
        %p128 = pneg %p127
      $region18: #{tpu_custom_call.1} parent=5 // pred_check_branch
        %130 = sbr.rel (%p128) target = $region20
      $region19: #{tpu_custom_call.1} parent=5 // pred_region
        // Predicated region
        $region21: #{tpu_custom_call.1} parent=19 // pred_check
          %p131 = pneg %p44
        $region22: #{tpu_custom_call.1} parent=19 // pred_check_branch
          %133 = sbr.rel (%p131) target = $region24
        $region23: #{tpu_custom_call.1} parent=19 // pred_region
          %s134 = sand.u32 %s34, 1
          %s135 = scalar_lea.sflag [#allocation3], %s134
          %s136 = sand.u32 %s34, 1
          %s137 = smul.addr %s136, 24
          %s138 = scalar_lea.vmem [#allocation2], %s137
          %s140 = ssub.s32 384, 384
          %141 = vsyncadd %s135, %s140
          %s142 = smul.addr %s19, 3
          %s143 = smul.addr %s142, 128
          %s144 = scalar_lea.hbm %s0, %s143
          %s145 = sshll.u32 %s138, 4
          %s146 = int_to_ptr.vmem [resolvable:$true] %s145
          %151 = dma.hbm_to_vmem [thread:$0]  %s144, 384, %s146, %s135, 128, 128, 8
        $region24: #{tpu_custom_call.1} parent=19 // pred_fallthru
          _
      $region20: #{tpu_custom_call.1} parent=5 // pred_fallthru
        _
      %p152 = scmp.le.s32.totalorder 1, %s12
      %p153 = scmp.lt.s32.totalorder %s12, 3
      %p154 = pnand %p152, %p153
      %p155 = pneg %p154
      // Predicated region
      $region25: #{tpu_custom_call.1} parent=5 // pred_check
        _
      $region26: #{tpu_custom_call.1} parent=5 // pred_check_branch
        %157 = sbr.rel (%p154) target = $region28
      $region27: #{tpu_custom_call.1} parent=5 // pred_region
        %s158 = ssub.s32 %s12, 1
        %s159 = sand.u32 %s37, 1
        %s160 = scalar_lea.sflag [#allocation3], %s159
        %s161 = sand.u32 %s37, 1
        %s162 = smul.addr %s161, 24
        %s163 = scalar_lea.vmem [#allocation2], %s162
        // Predicated region
        $region29: #{tpu_custom_call.1} parent=27 // pred_check
          %p164 = pneg %p50
        $region30: #{tpu_custom_call.1} parent=27 // pred_check_branch
          %166 = sbr.rel (%p164) target = $region32
        $region31: #{tpu_custom_call.1} parent=27 // pred_region
          %167 = dma.done %s160, 384
        $region32: #{tpu_custom_call.1} parent=27 // pred_fallthru
          _
        // Predicated region
        $region33: #{tpu_custom_call.1} parent=27 // pred_check
          %p168 = pneg %p71
        $region34: #{tpu_custom_call.1} parent=27 // pred_check_branch
          %170 = sbr.rel (%p168) target = $region36
        $region35: #{tpu_custom_call.1} parent=27 // pred_region
          %171 = dma.done [#allocation5], 8704
        $region36: #{tpu_custom_call.1} parent=27 // pred_fallthru
          _
        %s172 = sand.u32 %s37, 1
        %s173 = scalar_lea.sflag [#allocation3], %s172
        %s174 = sand.u32 %s37, 1
        %s175 = smul.addr %s174, 24
        %s176 = scalar_lea.vmem [#allocation2], %s175
        %p177 = pneg %p50
        %p178 = pneg %p47
        %p179 = pneg %p71
        %p180 = pneg %p68
        %p181 = pneg %p99
        %p182 = pneg %p96
        %p183 = scmp.lt.s32.totalorder %s21, 1
        %s184 = scalar_select %p183, %s21, 1
        %p185 = scmp.lt.s32.totalorder %s22, 0
        %s186 = scalar_select %p185, %s22, 0
        %s187 = smul.addr %s184, 17
        %s188 = sadd.s32 %s186, %s187
        %s189 = smul.addr %s188, 8
        %s190 = scalar_lea.vmem %s2, %s189
        %p191 = scmp.lt.s32.totalorder %s21, 1
        %s192 = scalar_select %p191, %s21, 1
        %p193 = scmp.lt.s32.totalorder %s22, 0
        %s194 = scalar_select %p193, %s22, 0
        %s195 = smul.addr %s192, 17
        %s196 = sadd.s32 %s194, %s195
        %s197 = smul.addr %s196, 8
        %s198 = scalar_lea.vmem %s2, %s197
        %s199 = smul.u32 %s22, 16
        %s200 = scalar_lea.vmem %s163, %s199 [#allocation2]
        %v201 = vld [vmem:[%s200] sm:$0xff]
        %v202 = vld [vmem:[%s200 + $0x8] sm:$0xff]
        %v203 = vld [vmem:[%s200 + $0x10] sm:$0xff]
        %v204 = vld [vmem:[#allocation4] sm:$0xff]
        %v205 = vld [vmem:[#allocation4 + $0x8] sm:$0xff]
        %v206 = vld [vmem:[#allocation4 + $0x10] sm:$0xff]
        %v207 = vld [vmem:[#allocation4 + $0x18] sm:$0xff]
        %v208 = vld [vmem:[#allocation4 + $0x20] sm:$0xff]
        %v209 = vld [vmem:[#allocation4 + $0x28] sm:$0xff]
        %v210 = vld [vmem:[#allocation4 + $0x30] sm:$0xff]
        %v211 = vld [vmem:[#allocation4 + $0x38] sm:$0xff]
        %v212 = vld [vmem:[#allocation4 + $0x40] sm:$0xff]
        %v213 = vld [vmem:[#allocation4 + $0x48] sm:$0xff]
        %v214 = vld [vmem:[#allocation4 + $0x50] sm:$0xff]
        %v215 = vld [vmem:[#allocation4 + $0x58] sm:$0xff]
        %v216 = vld [vmem:[#allocation4 + $0x60] sm:$0xff]
        %v217 = vld [vmem:[#allocation4 + $0x68] sm:$0xff]
        %v218 = vld [vmem:[#allocation4 + $0x70] sm:$0xff]
        %v219 = vld [vmem:[#allocation4 + $0x78] sm:$0xff]
        %v220 = vld [vmem:[#allocation4 + $0x80] sm:$0xff]
        %v221 = vld [vmem:[#allocation4 + $0x88] sm:$0xff]
        %v222 = vld [vmem:[#allocation4 + $0x90] sm:$0xff]
        %v223 = vld [vmem:[#allocation4 + $0x98] sm:$0xff]
        %v224 = vld [vmem:[#allocation4 + $0xa0] sm:$0xff]
        %v225 = vld [vmem:[#allocation4 + $0xa8] sm:$0xff]
        %v226 = vld [vmem:[#allocation4 + $0xb0] sm:$0xff]
        %v227 = vld [vmem:[#allocation4 + $0xb8] sm:$0xff]
        %v228 = vld [vmem:[#allocation4 + $0xc0] sm:$0xff]
        %v229 = vld [vmem:[#allocation4 + $0xc8] sm:$0xff]
        %v230 = vld [vmem:[#allocation4 + $0xd0] sm:$0xff]
        %v231 = vld [vmem:[#allocation4 + $0xd8] sm:$0xff]
        %v232 = vld [vmem:[#allocation4 + $0xe0] sm:$0xff]
        %v233 = vld [vmem:[#allocation4 + $0xe8] sm:$0xff]
        %v234 = vld [vmem:[#allocation4 + $0xf0] sm:$0xff]
        %v235 = vld [vmem:[#allocation4 + $0xf8] sm:$0xff]
        %v236 = vld [vmem:[#allocation4 + $0x100] sm:$0xff]
        %v237 = vld [vmem:[#allocation4 + $0x108] sm:$0xff]
        %v238 = vld [vmem:[#allocation4 + $0x110] sm:$0xff]
        %v239 = vld [vmem:[#allocation4 + $0x118] sm:$0xff]
        %v240 = vld [vmem:[#allocation4 + $0x120] sm:$0xff]
        %v241 = vld [vmem:[#allocation4 + $0x128] sm:$0xff]
        %v242 = vld [vmem:[#allocation4 + $0x130] sm:$0xff]
        %v243 = vld [vmem:[#allocation4 + $0x138] sm:$0xff]
        %v244 = vld [vmem:[#allocation4 + $0x140] sm:$0xff]
        %v245 = vld [vmem:[#allocation4 + $0x148] sm:$0xff]
        %v246 = vld [vmem:[#allocation4 + $0x150] sm:$0xff]
        %v247 = vld [vmem:[#allocation4 + $0x158] sm:$0xff]
        %v248 = vld [vmem:[#allocation4 + $0x160] sm:$0xff]
        %v249 = vld [vmem:[#allocation4 + $0x168] sm:$0xff]
        %v250 = vld [vmem:[#allocation4 + $0x170] sm:$0xff]
        %v251 = vld [vmem:[#allocation4 + $0x178] sm:$0xff]
        %v252 = vld [vmem:[#allocation4 + $0x180] sm:$0xff]
        %v253 = vld [vmem:[#allocation4 + $0x188] sm:$0xff]
        %v254 = vld [vmem:[#allocation4 + $0x190] sm:$0xff]
        %v255 = vld [vmem:[#allocation4 + $0x198] sm:$0xff]
        %v256 = vld [vmem:[#allocation4 + $0x1a0] sm:$0xff]
        %v257 = vld [vmem:[#allocation4 + $0x1a8] sm:$0xff]
        %v258 = vld [vmem:[#allocation4 + $0x1b0] sm:$0xff]
        %v259 = vld [vmem:[#allocation4 + $0x1b8] sm:$0xff]
        %v260 = vld [vmem:[#allocation4 + $0x1c0] sm:$0xff]
        %v261 = vld [vmem:[#allocation4 + $0x1c8] sm:$0xff]
        %v262 = vld [vmem:[#allocation4 + $0x1d0] sm:$0xff]
        %v263 = vld [vmem:[#allocation4 + $0x1d8] sm:$0xff]
        %v264 = vld [vmem:[#allocation4 + $0x1e0] sm:$0xff]
        %v265 = vld [vmem:[#allocation4 + $0x1e8] sm:$0xff]
        %v266 = vld [vmem:[#allocation4 + $0x1f0] sm:$0xff]
        %v267 = vld [vmem:[#allocation4 + $0x1f8] sm:$0xff]
        %v268 = vld [vmem:[#allocation4 + $0x200] sm:$0xff]
        %v269 = vld [vmem:[#allocation4 + $0x208] sm:$0xff]
        %v270 = vld [vmem:[#allocation4 + $0x210] sm:$0xff]
        %v271 = vld [vmem:[#allocation4 + $0x218] sm:$0xff]
        %306 = vrot.lane.b32.xlu0 %v204, 64
        %v307 = vpop.permute.xlu0 %306
        %308 = vrot.lane.b32.xlu0 %v206, 64
        %v309 = vpop.permute.xlu0 %308
        %310 = vrot.lane.b32.xlu0 %v208, 64
        %v311 = vpop.permute.xlu0 %310
        %312 = vrot.lane.b32.xlu0 %v210, 64
        %v313 = vpop.permute.xlu0 %312
        %314 = vrot.lane.b32.xlu0 %v212, 64
        %v315 = vpop.permute.xlu0 %314
        %316 = vrot.lane.b32.xlu0 %v214, 64
        %v317 = vpop.permute.xlu0 %316
        %318 = vrot.lane.b32.xlu0 %v216, 64
        %v319 = vpop.permute.xlu0 %318
        %320 = vrot.lane.b32.xlu0 %v218, 64
        %v321 = vpop.permute.xlu0 %320
        %322 = vrot.lane.b32.xlu0 %v220, 64
        %v323 = vpop.permute.xlu0 %322
        %324 = vrot.lane.b32.xlu0 %v222, 64
        %v325 = vpop.permute.xlu0 %324
        %326 = vrot.lane.b32.xlu0 %v224, 64
        %v327 = vpop.permute.xlu0 %326
        %328 = vrot.lane.b32.xlu0 %v226, 64
        %v329 = vpop.permute.xlu0 %328
        %330 = vrot.lane.b32.xlu0 %v228, 64
        %v331 = vpop.permute.xlu0 %330
        %332 = vrot.lane.b32.xlu0 %v230, 64
        %v333 = vpop.permute.xlu0 %332
        %334 = vrot.lane.b32.xlu0 %v232, 64
        %v335 = vpop.permute.xlu0 %334
        %336 = vrot.lane.b32.xlu0 %v234, 64
        %v337 = vpop.permute.xlu0 %336
        %338 = vrot.lane.b32.xlu0 %v236, 64
        %v339 = vpop.permute.xlu0 %338
        %340 = vrot.lane.b32.xlu0 %v238, 64
        %v341 = vpop.permute.xlu0 %340
        %342 = vrot.lane.b32.xlu0 %v240, 64
        %v343 = vpop.permute.xlu0 %342
        %344 = vrot.lane.b32.xlu0 %v242, 64
        %v345 = vpop.permute.xlu0 %344
        %346 = vrot.lane.b32.xlu0 %v244, 64
        %v347 = vpop.permute.xlu0 %346
        %348 = vrot.lane.b32.xlu0 %v246, 64
        %v349 = vpop.permute.xlu0 %348
        %350 = vrot.lane.b32.xlu0 %v248, 64
        %v351 = vpop.permute.xlu0 %350
        %352 = vrot.lane.b32.xlu0 %v250, 64
        %v353 = vpop.permute.xlu0 %352
        %354 = vrot.lane.b32.xlu0 %v252, 64
        %v355 = vpop.permute.xlu0 %354
        %356 = vrot.lane.b32.xlu0 %v254, 64
        %v357 = vpop.permute.xlu0 %356
        %358 = vrot.lane.b32.xlu0 %v256, 64
        %v359 = vpop.permute.xlu0 %358
        %360 = vrot.lane.b32.xlu0 %v258, 64
        %v361 = vpop.permute.xlu0 %360
        %362 = vrot.lane.b32.xlu0 %v260, 64
        %v363 = vpop.permute.xlu0 %362
        %364 = vrot.lane.b32.xlu0 %v262, 64
        %v365 = vpop.permute.xlu0 %364
        %366 = vrot.lane.b32.xlu0 %v264, 64
        %v367 = vpop.permute.xlu0 %366
        %368 = vrot.lane.b32.xlu0 %v266, 64
        %v369 = vpop.permute.xlu0 %368
        %370 = vrot.lane.b32.xlu0 %v268, 64
        %v371 = vpop.permute.xlu0 %370
        %372 = vrot.lane.b32.xlu0 %v270, 64
        %v373 = vpop.permute.xlu0 %372
        %vm377 = vcmask 1046528
        %v378 = vrot.slane %v201, 1
        %v379 = vrot.slane %v202, 1
        %v380 = vsel %vm377, %v378, %v379
        %v381 = vrot.slane %v203, 1
        %v382 = vsel %vm377, %v379, %v381
        %vm383 = vcmask 523264
        %v384 = vsel %vm383, %v307, 0
        %v386 = vsel %vm383, %v309, 0
        %v388 = vsel %vm383, %v311, 0
        %v390 = vsel %vm383, %v313, 0
        %v392 = vsel %vm383, %v315, 0
        %v394 = vsel %vm383, %v317, 0
        %v396 = vsel %vm383, %v319, 0
        %v398 = vsel %vm383, %v321, 0
        %v400 = vsel %vm383, %v323, 0
        %v402 = vsel %vm383, %v325, 0
        %v404 = vsel %vm383, %v327, 0
        %v406 = vsel %vm383, %v329, 0
        %v408 = vsel %vm383, %v331, 0
        %v410 = vsel %vm383, %v333, 0
        %v412 = vsel %vm383, %v335, 0
        %v414 = vsel %vm383, %v337, 0
        %v416 = vsel %vm383, %v339, 0
        %v418 = vsel %vm383, %v341, 0
        %v420 = vsel %vm383, %v343, 0
        %v422 = vsel %vm383, %v345, 0
        %v424 = vsel %vm383, %v347, 0
        %v426 = vsel %vm383, %v349, 0
        %v428 = vsel %vm383, %v351, 0
        %v430 = vsel %vm383, %v353, 0
        %v432 = vsel %vm383, %v355, 0
        %v434 = vsel %vm383, %v357, 0
        %v436 = vsel %vm383, %v359, 0
        %v438 = vsel %vm383, %v361, 0
        %v440 = vsel %vm383, %v363, 0
        %v442 = vsel %vm383, %v365, 0
        %v444 = vsel %vm383, %v367, 0
        %v446 = vsel %vm383, %v369, 0
        %v448 = vsel %vm383, %v371, 0
        %v450 = vsel %vm383, %v373, 0
        %v452 = vsel %vm383, %v380, 0
        %v454 = vsel %vm383, %v382, 0
        %456 = vmatprep.subr.mxu0 0.0
        %457 = vmatpush1.xpose.msra.mxu0 %v452
        %458 = vmatprep.subr.mxu0 0.0
        %459 = vmatpush1.xpose.msra.mxu0 %v454
        %460 = vmatprep.subr.mxu0 0.0
        %461 = vmatpush1.xpose.msra.mxu0 0.0
        %462 = vmatprep.subr.mxu0 0.0
        %463 = vmatpush1.xpose.msra.mxu0 0.0
        %464 = vmatprep.subr.mxu0 0.0
        %465 = vmatpush1.xpose.msra.mxu0 0.0
        %466 = vmatprep.subr.mxu0 0.0
        %467 = vmatpush1.xpose.msra.mxu0 0.0
        %468 = vmatprep.subr.mxu0 0.0
        %469 = vmatpush1.xpose.msra.mxu0 0.0
        %470 = vmatprep.subr.mxu0 0.0
        %471 = vmatpush1.xpose.msra.mxu0 0.0
        %472 = vmatprep.subr.mxu0 0.0
        %473 = vmatpush1.xpose.msra.mxu0 0.0
        %474 = vmatprep.subr.mxu0 0.0
        %475 = vmatpush1.xpose.msra.mxu0 0.0
        %476 = vmatprep.subr.mxu0 0.0
        %477 = vmatpush1.xpose.msra.mxu0 0.0
        %478 = vmatprep.subr.mxu0 0.0
        %479 = vmatpush1.xpose.msra.mxu0 0.0
        %480 = vmatprep.subr.mxu0 0.0
        %481 = vmatpush1.xpose.msra.mxu0 0.0
        %482 = vmatprep.subr.mxu0 0.0
        %483 = vmatpush1.xpose.msra.mxu0 0.0
        %484 = vmatprep.subr.mxu0 0.0
        %485 = vmatpush1.xpose.msra.mxu0 0.0
        %486 = vmatprep.subr.mxu0 0.0
        %487 = vmatpush1.xpose.msra.mxu0 0.0
        %488 = vmatprep.subr.mxu0 0.0
        %489 = vmatpush1.xpose.msra.mxu0 0.0
        %490 = vmatprep.subr.mxu0 0.0
        %491 = vmatpush1.xpose.msra.mxu0 0.0
        %492 = vmatprep.subr.mxu0 0.0
        %493 = vmatpush1.xpose.msra.mxu0 0.0
        %494 = vmatprep.subr.mxu0 0.0
        %495 = vmatpush1.xpose.msra.mxu0 0.0
        %496 = vmatprep.subr.mxu0 0.0
        %497 = vmatpush1.xpose.msra.mxu0 0.0
        %498 = vmatprep.subr.mxu0 0.0
        %499 = vmatpush1.xpose.msra.mxu0 0.0
        %500 = vmatprep.subr.mxu0 0.0
        %501 = vmatpush1.xpose.msra.mxu0 0.0
        %502 = vmatprep.subr.mxu0 0.0
        %503 = vmatpush1.xpose.msra.mxu0 0.0
        %504 = vmatprep.subr.mxu0 0.0
        %505 = vmatpush1.xpose.msra.mxu0 0.0
        %506 = vmatprep.subr.mxu0 0.0
        %507 = vmatpush1.xpose.msra.mxu0 0.0
        %508 = vmatprep.subr.mxu0 0.0
        %509 = vmatpush1.xpose.msra.mxu0 0.0
        %510 = vmatprep.subr.mxu0 0.0
        %511 = vmatpush1.xpose.msra.mxu0 0.0
        %512 = vmatprep.subr.mxu0 0.0
        %513 = vmatpush1.xpose.msra.mxu0 0.0
        %514 = vmatprep.subr.mxu0 0.0
        %515 = vmatpush1.xpose.msra.mxu0 0.0
        %516 = vmatprep.subr.mxu0 0.0
        %517 = vmatpush1.xpose.msra.mxu0 0.0
        %518 = vmatprep.subr.mxu0 0.0
        %519 = vmatpush1.xpose.msra.mxu0 0.0
        %520 = vmatprep.mubr.f32.mxu0 0.0
        %521 = vmatmul.mubr.f32.gmra.mrb[0].mxu0 %v384
        %v522 = vpop.f32.mrb[0].mxu0
        %v523 = vadd.f32 0.0, %v522
        %v524 = vpop.f32.mrb[0].mxu0
        %525 = vmatprep.mubr.f32.mxu0 0.0
        %526 = vmatmul.mubr.f32.gmra.mrb[0].mxu0 %v386
        %v527 = vpop.f32.mrb[0].mxu0
        %v528 = vadd.f32 0.0, %v527
        %v529 = vpop.f32.mrb[0].mxu0
        %530 = vmatprep.mubr.f32.mxu0 0.0
        %531 = vmatmul.mubr.f32.gmra.mrb[0].mxu0 %v388
        %v532 = vpop.f32.mrb[0].mxu0
        %v533 = vadd.f32 0.0, %v532
        %v534 = vpop.f32.mrb[0].mxu0
        %535 = vmatprep.mubr.f32.mxu0 0.0
        %536 = vmatmul.mubr.f32.gmra.mrb[0].mxu0 %v390
        %v537 = vpop.f32.mrb[0].mxu0
        %v538 = vadd.f32 0.0, %v537
        %v539 = vpop.f32.mrb[0].mxu0
        %540 = vmatprep.mubr.f32.mxu0 0.0
        %541 = vmatmul.mubr.f32.gmra.mrb[0].mxu0 %v392
        %v542 = vpop.f32.mrb[0].mxu0
        %v543 = vadd.f32 0.0, %v542
        %v544 = vpop.f32.mrb[0].mxu0
        %545 = vmatprep.mubr.f32.mxu0 0.0
        %546 = vmatmul.mubr.f32.gmra.mrb[0].mxu0 %v394
        %v547 = vpop.f32.mrb[0].mxu0
        %v548 = vadd.f32 0.0, %v547
        %v549 = vpop.f32.mrb[0].mxu0
        %550 = vmatprep.mubr.f32.mxu0 0.0
        %551 = vmatmul.mubr.f32.gmra.mrb[0].mxu0 %v396
        %v552 = vpop.f32.mrb[0].mxu0
        %v553 = vadd.f32 0.0, %v552
        %v554 = vpop.f32.mrb[0].mxu0
        %555 = vmatprep.mubr.f32.mxu0 0.0
        %556 = vmatmul.mubr.f32.gmra.mrb[0].mxu0 %v398
        %v557 = vpop.f32.mrb[0].mxu0
        %v558 = vadd.f32 0.0, %v557
        %v559 = vpop.f32.mrb[0].mxu0
        %560 = vmatprep.mubr.f32.mxu0 0.0
        %561 = vmatmul.mubr.f32.gmra.mrb[0].mxu0 %v400
        %v562 = vpop.f32.mrb[0].mxu0
        %v563 = vadd.f32 0.0, %v562
        %v564 = vpop.f32.mrb[0].mxu0
        %565 = vmatprep.mubr.f32.mxu0 0.0
        %566 = vmatmul.mubr.f32.gmra.mrb[0].mxu0 %v402
        %v567 = vpop.f32.mrb[0].mxu0
        %v568 = vadd.f32 0.0, %v567
        %v569 = vpop.f32.mrb[0].mxu0
        %570 = vmatprep.mubr.f32.mxu0 0.0
        %571 = vmatmul.mubr.f32.gmra.mrb[0].mxu0 %v404
        %v572 = vpop.f32.mrb[0].mxu0
        %v573 = vadd.f32 0.0, %v572
        %v574 = vpop.f32.mrb[0].mxu0
        %575 = vmatprep.mubr.f32.mxu0 0.0
        %576 = vmatmul.mubr.f32.gmra.mrb[0].mxu0 %v406
        %v577 = vpop.f32.mrb[0].mxu0
        %v578 = vadd.f32 0.0, %v577
        %v579 = vpop.f32.mrb[0].mxu0
        %580 = vmatprep.mubr.f32.mxu0 0.0
        %581 = vmatmul.mubr.f32.gmra.mrb[0].mxu0 %v408
        %v582 = vpop.f32.mrb[0].mxu0
        %v583 = vadd.f32 0.0, %v582
        %v584 = vpop.f32.mrb[0].mxu0
        %585 = vmatprep.mubr.f32.mxu0 0.0
        %586 = vmatmul.mubr.f32.gmra.mrb[0].mxu0 %v410
        %v587 = vpop.f32.mrb[0].mxu0
        %v588 = vadd.f32 0.0, %v587
        %v589 = vpop.f32.mrb[0].mxu0
        %590 = vmatprep.mubr.f32.mxu0 0.0
        %591 = vmatmul.mubr.f32.gmra.mrb[0].mxu0 %v412
        %v592 = vpop.f32.mrb[0].mxu0
        %v593 = vadd.f32 0.0, %v592
        %v594 = vpop.f32.mrb[0].mxu0
        %595 = vmatprep.mubr.f32.mxu0 0.0
        %596 = vmatmul.mubr.f32.gmra.mrb[0].mxu0 %v414
        %v597 = vpop.f32.mrb[0].mxu0
        %v598 = vadd.f32 0.0, %v597
        %v599 = vpop.f32.mrb[0].mxu0
        %600 = vmatprep.mubr.f32.mxu0 0.0
        %601 = vmatmul.mubr.f32.gmra.mrb[0].mxu0 %v416
        %v602 = vpop.f32.mrb[0].mxu0
        %v603 = vadd.f32 0.0, %v602
        %v604 = vpop.f32.mrb[0].mxu0
        %605 = vmatprep.mubr.f32.mxu0 0.0
        %606 = vmatmul.mubr.f32.gmra.mrb[0].mxu0 %v418
        %v607 = vpop.f32.mrb[0].mxu0
        %v608 = vadd.f32 0.0, %v607
        %v609 = vpop.f32.mrb[0].mxu0
        %610 = vmatprep.mubr.f32.mxu0 0.0
        %611 = vmatmul.mubr.f32.gmra.mrb[0].mxu0 %v420
        %v612 = vpop.f32.mrb[0].mxu0
        %v613 = vadd.f32 0.0, %v612
        %v614 = vpop.f32.mrb[0].mxu0
        %615 = vmatprep.mubr.f32.mxu0 0.0
        %616 = vmatmul.mubr.f32.gmra.mrb[0].mxu0 %v422
        %v617 = vpop.f32.mrb[0].mxu0
        %v618 = vadd.f32 0.0, %v617
        %v619 = vpop.f32.mrb[0].mxu0
        %620 = vmatprep.mubr.f32.mxu0 0.0
        %621 = vmatmul.mubr.f32.gmra.mrb[0].mxu0 %v424
        %v622 = vpop.f32.mrb[0].mxu0
        %v623 = vadd.f32 0.0, %v622
        %v624 = vpop.f32.mrb[0].mxu0
        %625 = vmatprep.mubr.f32.mxu0 0.0
        %626 = vmatmul.mubr.f32.gmra.mrb[0].mxu0 %v426
        %v627 = vpop.f32.mrb[0].mxu0
        %v628 = vadd.f32 0.0, %v627
        %v629 = vpop.f32.mrb[0].mxu0
        %630 = vmatprep.mubr.f32.mxu0 0.0
        %631 = vmatmul.mubr.f32.gmra.mrb[0].mxu0 %v428
        %v632 = vpop.f32.mrb[0].mxu0
        %v633 = vadd.f32 0.0, %v632
        %v634 = vpop.f32.mrb[0].mxu0
        %635 = vmatprep.mubr.f32.mxu0 0.0
        %636 = vmatmul.mubr.f32.gmra.mrb[0].mxu0 %v430
        %v637 = vpop.f32.mrb[0].mxu0
        %v638 = vadd.f32 0.0, %v637
        %v639 = vpop.f32.mrb[0].mxu0
        %640 = vmatprep.mubr.f32.mxu0 0.0
        %641 = vmatmul.mubr.f32.gmra.mrb[0].mxu0 %v432
        %v642 = vpop.f32.mrb[0].mxu0
        %v643 = vadd.f32 0.0, %v642
        %v644 = vpop.f32.mrb[0].mxu0
        %645 = vmatprep.mubr.f32.mxu0 0.0
        %646 = vmatmul.mubr.f32.gmra.mrb[0].mxu0 %v434
        %v647 = vpop.f32.mrb[0].mxu0
        %v648 = vadd.f32 0.0, %v647
        %v649 = vpop.f32.mrb[0].mxu0
        %650 = vmatprep.mubr.f32.mxu0 0.0
        %651 = vmatmul.mubr.f32.gmra.mrb[0].mxu0 %v436
        %v652 = vpop.f32.mrb[0].mxu0
        %v653 = vadd.f32 0.0, %v652
        %v654 = vpop.f32.mrb[0].mxu0
        %655 = vmatprep.mubr.f32.mxu0 0.0
        %656 = vmatmul.mubr.f32.gmra.mrb[0].mxu0 %v438
        %v657 = vpop.f32.mrb[0].mxu0
        %v658 = vadd.f32 0.0, %v657
        %v659 = vpop.f32.mrb[0].mxu0
        %660 = vmatprep.mubr.f32.mxu0 0.0
        %661 = vmatmul.mubr.f32.gmra.mrb[0].mxu0 %v440
        %v662 = vpop.f32.mrb[0].mxu0
        %v663 = vadd.f32 0.0, %v662
        %v664 = vpop.f32.mrb[0].mxu0
        %665 = vmatprep.mubr.f32.mxu0 0.0
        %666 = vmatmul.mubr.f32.gmra.mrb[0].mxu0 %v442
        %v667 = vpop.f32.mrb[0].mxu0
        %v668 = vadd.f32 0.0, %v667
        %v669 = vpop.f32.mrb[0].mxu0
        %670 = vmatprep.mubr.f32.mxu0 0.0
        %671 = vmatmul.mubr.f32.gmra.mrb[0].mxu0 %v444
        %v672 = vpop.f32.mrb[0].mxu0
        %v673 = vadd.f32 0.0, %v672
        %v674 = vpop.f32.mrb[0].mxu0
        %675 = vmatprep.mubr.f32.mxu0 0.0
        %676 = vmatmul.mubr.f32.gmra.mrb[0].mxu0 %v446
        %v677 = vpop.f32.mrb[0].mxu0
        %v678 = vadd.f32 0.0, %v677
        %v679 = vpop.f32.mrb[0].mxu0
        %680 = vmatprep.mubr.f32.mxu0 0.0
        %681 = vmatmul.mubr.f32.gmra.mrb[0].mxu0 %v448
        %v682 = vpop.f32.mrb[0].mxu0
        %v683 = vadd.f32 0.0, %v682
        %v684 = vpop.f32.mrb[0].mxu0
        %685 = vmatprep.mubr.f32.mxu0 0.0
        %686 = vmatmul.mubr.f32.gmra.mrb[0].mxu0 %v450
        %v687 = vpop.f32.mrb[0].mxu0
        %v688 = vadd.f32 0.0, %v687
        %v689 = vpop.f32.mrb[0].mxu0
        %690 = vdwg.mxu0
        %v691 = vsel %vm383, %v204, 0
        %v693 = vsel %vm383, %v206, 0
        %v695 = vsel %vm383, %v208, 0
        %v697 = vsel %vm383, %v210, 0
        %v699 = vsel %vm383, %v212, 0
        %v701 = vsel %vm383, %v214, 0
        %v703 = vsel %vm383, %v216, 0
        %v705 = vsel %vm383, %v218, 0
        %v707 = vsel %vm383, %v220, 0
        %v709 = vsel %vm383, %v222, 0
        %v711 = vsel %vm383, %v224, 0
        %v713 = vsel %vm383, %v226, 0
        %v715 = vsel %vm383, %v228, 0
        %v717 = vsel %vm383, %v230, 0
        %v719 = vsel %vm383, %v232, 0
        %v721 = vsel %vm383, %v234, 0
        %v723 = vsel %vm383, %v236, 0
        %v725 = vsel %vm383, %v238, 0
        %v727 = vsel %vm383, %v240, 0
        %v729 = vsel %vm383, %v242, 0
        %v731 = vsel %vm383, %v244, 0
        %v733 = vsel %vm383, %v246, 0
        %v735 = vsel %vm383, %v248, 0
        %v737 = vsel %vm383, %v250, 0
        %v739 = vsel %vm383, %v252, 0
        %v741 = vsel %vm383, %v254, 0
        %v743 = vsel %vm383, %v256, 0
        %v745 = vsel %vm383, %v258, 0
        %v747 = vsel %vm383, %v260, 0
        %v749 = vsel %vm383, %v262, 0
        %v751 = vsel %vm383, %v264, 0
        %v753 = vsel %vm383, %v266, 0
        %v755 = vsel %vm383, %v268, 0
        %v757 = vsel %vm383, %v270, 0
        %v759 = vsel %vm383, %v201, 0
        %v761 = vsel %vm383, %v202, 0
        %763 = vmatprep.subr.mxu0 0.0
        %764 = vmatpush1.xpose.msra.mxu0 %v759
        %765 = vmatprep.subr.mxu0 0.0
        %766 = vmatpush1.xpose.msra.mxu0 %v761
        %767 = vmatprep.subr.mxu0 0.0
        %768 = vmatpush1.xpose.msra.mxu0 0.0
        %769 = vmatprep.subr.mxu0 0.0
        %770 = vmatpush1.xpose.msra.mxu0 0.0
        %771 = vmatprep.subr.mxu0 0.0
        %772 = vmatpush1.xpose.msra.mxu0 0.0
        %773 = vmatprep.subr.mxu0 0.0
        %774 = vmatpush1.xpose.msra.mxu0 0.0
        %775 = vmatprep.subr.mxu0 0.0
        %776 = vmatpush1.xpose.msra.mxu0 0.0
        %777 = vmatprep.subr.mxu0 0.0
        %778 = vmatpush1.xpose.msra.mxu0 0.0
        %779 = vmatprep.subr.mxu0 0.0
        %780 = vmatpush1.xpose.msra.mxu0 0.0
        %781 = vmatprep.subr.mxu0 0.0
        %782 = vmatpush1.xpose.msra.mxu0 0.0
        %783 = vmatprep.subr.mxu0 0.0
        %784 = vmatpush1.xpose.msra.mxu0 0.0
        %785 = vmatprep.subr.mxu0 0.0
        %786 = vmatpush1.xpose.msra.mxu0 0.0
        %787 = vmatprep.subr.mxu0 0.0
        %788 = vmatpush1.xpose.msra.mxu0 0.0
        %789 = vmatprep.subr.mxu0 0.0
        %790 = vmatpush1.xpose.msra.mxu0 0.0
        %791 = vmatprep.subr.mxu0 0.0
        %792 = vmatpush1.xpose.msra.mxu0 0.0
        %793 = vmatprep.subr.mxu0 0.0
        %794 = vmatpush1.xpose.msra.mxu0 0.0
        %795 = vmatprep.subr.mxu0 0.0
        %796 = vmatpush1.xpose.msra.mxu0 0.0
        %797 = vmatprep.subr.mxu0 0.0
        %798 = vmatpush1.xpose.msra.mxu0 0.0
        %799 = vmatprep.subr.mxu0 0.0
        %800 = vmatpush1.xpose.msra.mxu0 0.0
        %801 = vmatprep.subr.mxu0 0.0
        %802 = vmatpush1.xpose.msra.mxu0 0.0
        %803 = vmatprep.subr.mxu0 0.0
        %804 = vmatpush1.xpose.msra.mxu0 0.0
        %805 = vmatprep.subr.mxu0 0.0
        %806 = vmatpush1.xpose.msra.mxu0 0.0
        %807 = vmatprep.subr.mxu0 0.0
        %808 = vmatpush1.xpose.msra.mxu0 0.0
        %809 = vmatprep.subr.mxu0 0.0
        %810 = vmatpush1.xpose.msra.mxu0 0.0
        %811 = vmatprep.subr.mxu0 0.0
        %812 = vmatpush1.xpose.msra.mxu0 0.0
        %813 = vmatprep.subr.mxu0 0.0
        %814 = vmatpush1.xpose.msra.mxu0 0.0
        %815 = vmatprep.subr.mxu0 0.0
        %816 = vmatpush1.xpose.msra.mxu0 0.0
        %817 = vmatprep.subr.mxu0 0.0
        %818 = vmatpush1.xpose.msra.mxu0 0.0
        %819 = vmatprep.subr.mxu0 0.0
        %820 = vmatpush1.xpose.msra.mxu0 0.0
        %821 = vmatprep.subr.mxu0 0.0
        %822 = vmatpush1.xpose.msra.mxu0 0.0
        %823 = vmatprep.subr.mxu0 0.0
        %824 = vmatpush1.xpose.msra.mxu0 0.0
        %825 = vmatprep.subr.mxu0 0.0
        %826 = vmatpush1.xpose.msra.mxu0 0.0
        %827 = vmatprep.mubr.f32.mxu0 0.0
        %828 = vmatmul.mubr.f32.gmra.mrb[0].mxu0 %v691
        %v829 = vpop.f32.mrb[0].mxu0
        %v830 = vadd.f32 %v523, %v829
        %v831 = vpop.f32.mrb[0].mxu0
        %832 = vmatprep.mubr.f32.mxu0 0.0
        %833 = vmatmul.mubr.f32.gmra.mrb[0].mxu0 %v693
        %v834 = vpop.f32.mrb[0].mxu0
        %v835 = vadd.f32 %v528, %v834
        %v836 = vpop.f32.mrb[0].mxu0
        %837 = vmatprep.mubr.f32.mxu0 0.0
        %838 = vmatmul.mubr.f32.gmra.mrb[0].mxu0 %v695
        %v839 = vpop.f32.mrb[0].mxu0
        %v840 = vadd.f32 %v533, %v839
        %v841 = vpop.f32.mrb[0].mxu0
        %842 = vmatprep.mubr.f32.mxu0 0.0
        %843 = vmatmul.mubr.f32.gmra.mrb[0].mxu0 %v697
        %v844 = vpop.f32.mrb[0].mxu0
        %v845 = vadd.f32 %v538, %v844
        %v846 = vpop.f32.mrb[0].mxu0
        %847 = vmatprep.mubr.f32.mxu0 0.0
        %848 = vmatmul.mubr.f32.gmra.mrb[0].mxu0 %v699
        %v849 = vpop.f32.mrb[0].mxu0
        %v850 = vadd.f32 %v543, %v849
        %v851 = vpop.f32.mrb[0].mxu0
        %852 = vmatprep.mubr.f32.mxu0 0.0
        %853 = vmatmul.mubr.f32.gmra.mrb[0].mxu0 %v701
        %v854 = vpop.f32.mrb[0].mxu0
        %v855 = vadd.f32 %v548, %v854
        %v856 = vpop.f32.mrb[0].mxu0
        %857 = vmatprep.mubr.f32.mxu0 0.0
        %858 = vmatmul.mubr.f32.gmra.mrb[0].mxu0 %v703
        %v859 = vpop.f32.mrb[0].mxu0
        %v860 = vadd.f32 %v553, %v859
        %v861 = vpop.f32.mrb[0].mxu0
        %862 = vmatprep.mubr.f32.mxu0 0.0
        %863 = vmatmul.mubr.f32.gmra.mrb[0].mxu0 %v705
        %v864 = vpop.f32.mrb[0].mxu0
        %v865 = vadd.f32 %v558, %v864
        %v866 = vpop.f32.mrb[0].mxu0
        %867 = vmatprep.mubr.f32.mxu0 0.0
        %868 = vmatmul.mubr.f32.gmra.mrb[0].mxu0 %v707
        %v869 = vpop.f32.mrb[0].mxu0
        %v870 = vadd.f32 %v563, %v869
        %v871 = vpop.f32.mrb[0].mxu0
        %872 = vmatprep.mubr.f32.mxu0 0.0
        %873 = vmatmul.mubr.f32.gmra.mrb[0].mxu0 %v709
        %v874 = vpop.f32.mrb[0].mxu0
        %v875 = vadd.f32 %v568, %v874
        %v876 = vpop.f32.mrb[0].mxu0
        %877 = vmatprep.mubr.f32.mxu0 0.0
        %878 = vmatmul.mubr.f32.gmra.mrb[0].mxu0 %v711
        %v879 = vpop.f32.mrb[0].mxu0
        %v880 = vadd.f32 %v573, %v879
        %v881 = vpop.f32.mrb[0].mxu0
        %882 = vmatprep.mubr.f32.mxu0 0.0
        %883 = vmatmul.mubr.f32.gmra.mrb[0].mxu0 %v713
        %v884 = vpop.f32.mrb[0].mxu0
        %v885 = vadd.f32 %v578, %v884
        %v886 = vpop.f32.mrb[0].mxu0
        %887 = vmatprep.mubr.f32.mxu0 0.0
        %888 = vmatmul.mubr.f32.gmra.mrb[0].mxu0 %v715
        %v889 = vpop.f32.mrb[0].mxu0
        %v890 = vadd.f32 %v583, %v889
        %v891 = vpop.f32.mrb[0].mxu0
        %892 = vmatprep.mubr.f32.mxu0 0.0
        %893 = vmatmul.mubr.f32.gmra.mrb[0].mxu0 %v717
        %v894 = vpop.f32.mrb[0].mxu0
        %v895 = vadd.f32 %v588, %v894
        %v896 = vpop.f32.mrb[0].mxu0
        %897 = vmatprep.mubr.f32.mxu0 0.0
        %898 = vmatmul.mubr.f32.gmra.mrb[0].mxu0 %v719
        %v899 = vpop.f32.mrb[0].mxu0
        %v900 = vadd.f32 %v593, %v899
        %v901 = vpop.f32.mrb[0].mxu0
        %902 = vmatprep.mubr.f32.mxu0 0.0
        %903 = vmatmul.mubr.f32.gmra.mrb[0].mxu0 %v721
        %v904 = vpop.f32.mrb[0].mxu0
        %v905 = vadd.f32 %v598, %v904
        %v906 = vpop.f32.mrb[0].mxu0
        %907 = vmatprep.mubr.f32.mxu0 0.0
        %908 = vmatmul.mubr.f32.gmra.mrb[0].mxu0 %v723
        %v909 = vpop.f32.mrb[0].mxu0
        %v910 = vadd.f32 %v603, %v909
        %v911 = vpop.f32.mrb[0].mxu0
        %912 = vmatprep.mubr.f32.mxu0 0.0
        %913 = vmatmul.mubr.f32.gmra.mrb[0].mxu0 %v725
        %v914 = vpop.f32.mrb[0].mxu0
        %v915 = vadd.f32 %v608, %v914
        %v916 = vpop.f32.mrb[0].mxu0
        %917 = vmatprep.mubr.f32.mxu0 0.0
        %918 = vmatmul.mubr.f32.gmra.mrb[0].mxu0 %v727
        %v919 = vpop.f32.mrb[0].mxu0
        %v920 = vadd.f32 %v613, %v919
        %v921 = vpop.f32.mrb[0].mxu0
        %922 = vmatprep.mubr.f32.mxu0 0.0
        %923 = vmatmul.mubr.f32.gmra.mrb[0].mxu0 %v729
        %v924 = vpop.f32.mrb[0].mxu0
        %v925 = vadd.f32 %v618, %v924
        %v926 = vpop.f32.mrb[0].mxu0
        %927 = vmatprep.mubr.f32.mxu0 0.0
        %928 = vmatmul.mubr.f32.gmra.mrb[0].mxu0 %v731
        %v929 = vpop.f32.mrb[0].mxu0
        %v930 = vadd.f32 %v623, %v929
        %v931 = vpop.f32.mrb[0].mxu0
        %932 = vmatprep.mubr.f32.mxu0 0.0
        %933 = vmatmul.mubr.f32.gmra.mrb[0].mxu0 %v733
        %v934 = vpop.f32.mrb[0].mxu0
        %v935 = vadd.f32 %v628, %v934
        %v936 = vpop.f32.mrb[0].mxu0
        %937 = vmatprep.mubr.f32.mxu0 0.0
        %938 = vmatmul.mubr.f32.gmra.mrb[0].mxu0 %v735
        %v939 = vpop.f32.mrb[0].mxu0
        %v940 = vadd.f32 %v633, %v939
        %v941 = vpop.f32.mrb[0].mxu0
        %942 = vmatprep.mubr.f32.mxu0 0.0
        %943 = vmatmul.mubr.f32.gmra.mrb[0].mxu0 %v737
        %v944 = vpop.f32.mrb[0].mxu0
        %v945 = vadd.f32 %v638, %v944
        %v946 = vpop.f32.mrb[0].mxu0
        %947 = vmatprep.mubr.f32.mxu0 0.0
        %948 = vmatmul.mubr.f32.gmra.mrb[0].mxu0 %v739
        %v949 = vpop.f32.mrb[0].mxu0
        %v950 = vadd.f32 %v643, %v949
        %v951 = vpop.f32.mrb[0].mxu0
        %952 = vmatprep.mubr.f32.mxu0 0.0
        %953 = vmatmul.mubr.f32.gmra.mrb[0].mxu0 %v741
        %v954 = vpop.f32.mrb[0].mxu0
        %v955 = vadd.f32 %v648, %v954
        %v956 = vpop.f32.mrb[0].mxu0
        %957 = vmatprep.mubr.f32.mxu0 0.0
        %958 = vmatmul.mubr.f32.gmra.mrb[0].mxu0 %v743
        %v959 = vpop.f32.mrb[0].mxu0
        %v960 = vadd.f32 %v653, %v959
        %v961 = vpop.f32.mrb[0].mxu0
        %962 = vmatprep.mubr.f32.mxu0 0.0
        %963 = vmatmul.mubr.f32.gmra.mrb[0].mxu0 %v745
        %v964 = vpop.f32.mrb[0].mxu0
        %v965 = vadd.f32 %v658, %v964
        %v966 = vpop.f32.mrb[0].mxu0
        %967 = vmatprep.mubr.f32.mxu0 0.0
        %968 = vmatmul.mubr.f32.gmra.mrb[0].mxu0 %v747
        %v969 = vpop.f32.mrb[0].mxu0
        %v970 = vadd.f32 %v663, %v969
        %v971 = vpop.f32.mrb[0].mxu0
        %972 = vmatprep.mubr.f32.mxu0 0.0
        %973 = vmatmul.mubr.f32.gmra.mrb[0].mxu0 %v749
        %v974 = vpop.f32.mrb[0].mxu0
        %v975 = vadd.f32 %v668, %v974
        %v976 = vpop.f32.mrb[0].mxu0
        %977 = vmatprep.mubr.f32.mxu0 0.0
        %978 = vmatmul.mubr.f32.gmra.mrb[0].mxu0 %v751
        %v979 = vpop.f32.mrb[0].mxu0
        %v980 = vadd.f32 %v673, %v979
        %v981 = vpop.f32.mrb[0].mxu0
        %982 = vmatprep.mubr.f32.mxu0 0.0
        %983 = vmatmul.mubr.f32.gmra.mrb[0].mxu0 %v753
        %v984 = vpop.f32.mrb[0].mxu0
        %v985 = vadd.f32 %v678, %v984
        %v986 = vpop.f32.mrb[0].mxu0
        %987 = vmatprep.mubr.f32.mxu0 0.0
        %988 = vmatmul.mubr.f32.gmra.mrb[0].mxu0 %v755
        %v989 = vpop.f32.mrb[0].mxu0
        %v990 = vadd.f32 %v683, %v989
        %v991 = vpop.f32.mrb[0].mxu0
        %992 = vmatprep.mubr.f32.mxu0 0.0
        %993 = vmatmul.mubr.f32.gmra.mrb[0].mxu0 %v757
        %v994 = vpop.f32.mrb[0].mxu0
        %v995 = vadd.f32 %v688, %v994
        %v996 = vpop.f32.mrb[0].mxu0
        %997 = vdwg.mxu0
        %vm998 = vcmask 1045504
        %v999 = vrot.slane %v201, 2
        %v1000 = vrot.slane %v202, 2
        %v1001 = vsel %vm998, %v999, %v1000
        %v1002 = vrot.slane %v203, 2
        %v1003 = vsel %vm998, %v1000, %v1002
        %v1005 = vsel %vm383, %v205, 0
        %v1008 = vsel %vm383, %v207, 0
        %v1011 = vsel %vm383, %v209, 0
        %v1014 = vsel %vm383, %v211, 0
        %v1017 = vsel %vm383, %v213, 0
        %v1020 = vsel %vm383, %v215, 0
        %v1023 = vsel %vm383, %v217, 0
        %v1026 = vsel %vm383, %v219, 0
        %v1029 = vsel %vm383, %v221, 0
        %v1032 = vsel %vm383, %v223, 0
        %v1035 = vsel %vm383, %v225, 0
        %v1038 = vsel %vm383, %v227, 0
        %v1041 = vsel %vm383, %v229, 0
        %v1044 = vsel %vm383, %v231, 0
        %v1047 = vsel %vm383, %v233, 0
        %v1050 = vsel %vm383, %v235, 0
        %v1053 = vsel %vm383, %v237, 0
        %v1056 = vsel %vm383, %v239, 0
        %v1059 = vsel %vm383, %v241, 0
        %v1062 = vsel %vm383, %v243, 0
        %v1065 = vsel %vm383, %v245, 0
        %v1068 = vsel %vm383, %v247, 0
        %v1071 = vsel %vm383, %v249, 0
        %v1074 = vsel %vm383, %v251, 0
        %v1077 = vsel %vm383, %v253, 0
        %v1080 = vsel %vm383, %v255, 0
        %v1083 = vsel %vm383, %v257, 0
        %v1086 = vsel %vm383, %v259, 0
        %v1089 = vsel %vm383, %v261, 0
        %v1092 = vsel %vm383, %v263, 0
        %v1095 = vsel %vm383, %v265, 0
        %v1098 = vsel %vm383, %v267, 0
        %v1101 = vsel %vm383, %v269, 0
        %v1104 = vsel %vm383, %v271, 0
        %v1106 = vsel %vm383, %v1001, 0
        %v1108 = vsel %vm383, %v1003, 0
        %1110 = vmatprep.subr.mxu0 0.0
        %1111 = vmatpush1.xpose.msra.mxu0 %v1106
        %1112 = vmatprep.subr.mxu0 0.0
        %1113 = vmatpush1.xpose.msra.mxu0 %v1108
        %1114 = vmatprep.subr.mxu0 0.0
        %1115 = vmatpush1.xpose.msra.mxu0 0.0
        %1116 = vmatprep.subr.mxu0 0.0
        %1117 = vmatpush1.xpose.msra.mxu0 0.0
        %1118 = vmatprep.subr.mxu0 0.0
        %1119 = vmatpush1.xpose.msra.mxu0 0.0
        %1120 = vmatprep.subr.mxu0 0.0
        %1121 = vmatpush1.xpose.msra.mxu0 0.0
        %1122 = vmatprep.subr.mxu0 0.0
        %1123 = vmatpush1.xpose.msra.mxu0 0.0
        %1124 = vmatprep.subr.mxu0 0.0
        %1125 = vmatpush1.xpose.msra.mxu0 0.0
        %1126 = vmatprep.subr.mxu0 0.0
        %1127 = vmatpush1.xpose.msra.mxu0 0.0
        %1128 = vmatprep.subr.mxu0 0.0
        %1129 = vmatpush1.xpose.msra.mxu0 0.0
        %1130 = vmatprep.subr.mxu0 0.0
        %1131 = vmatpush1.xpose.msra.mxu0 0.0
        %1132 = vmatprep.subr.mxu0 0.0
        %1133 = vmatpush1.xpose.msra.mxu0 0.0
        %1134 = vmatprep.subr.mxu0 0.0
        %1135 = vmatpush1.xpose.msra.mxu0 0.0
        %1136 = vmatprep.subr.mxu0 0.0
        %1137 = vmatpush1.xpose.msra.mxu0 0.0
        %1138 = vmatprep.subr.mxu0 0.0
        %1139 = vmatpush1.xpose.msra.mxu0 0.0
        %1140 = vmatprep.subr.mxu0 0.0
        %1141 = vmatpush1.xpose.msra.mxu0 0.0
        %1142 = vmatprep.subr.mxu0 0.0
        %1143 = vmatpush1.xpose.msra.mxu0 0.0
        %1144 = vmatprep.subr.mxu0 0.0
        %1145 = vmatpush1.xpose.msra.mxu0 0.0
        %1146 = vmatprep.subr.mxu0 0.0
        %1147 = vmatpush1.xpose.msra.mxu0 0.0
        %1148 = vmatprep.subr.mxu0 0.0
        %1149 = vmatpush1.xpose.msra.mxu0 0.0
        %1150 = vmatprep.subr.mxu0 0.0
        %1151 = vmatpush1.xpose.msra.mxu0 0.0
        %1152 = vmatprep.subr.mxu0 0.0
        %1153 = vmatpush1.xpose.msra.mxu0 0.0
        %1154 = vmatprep.subr.mxu0 0.0
        %1155 = vmatpush1.xpose.msra.mxu0 0.0
        %1156 = vmatprep.subr.mxu0 0.0
        %1157 = vmatpush1.xpose.msra.mxu0 0.0
        %1158 = vmatprep.subr.mxu0 0.0
        %1159 = vmatpush1.xpose.msra.mxu0 0.0
        %1160 = vmatprep.subr.mxu0 0.0
        %1161 = vmatpush1.xpose.msra.mxu0 0.0
        %1162 = vmatprep.subr.mxu0 0.0
        %1163 = vmatpush1.xpose.msra.mxu0 0.0
        %1164 = vmatprep.subr.mxu0 0.0
        %1165 = vmatpush1.xpose.msra.mxu0 0.0
        %1166 = vmatprep.subr.mxu0 0.0
        %1167 = vmatpush1.xpose.msra.mxu0 0.0
        %1168 = vmatprep.subr.mxu0 0.0
        %1169 = vmatpush1.xpose.msra.mxu0 0.0
        %1170 = vmatprep.subr.mxu0 0.0
        %1171 = vmatpush1.xpose.msra.mxu0 0.0
        %1172 = vmatprep.subr.mxu0 0.0
        %1173 = vmatpush1.xpose.msra.mxu0 0.0
        %1174 = vmatprep.mubr.f32.mxu0 0.0
        %1175 = vmatmul.mubr.f32.gmra.mrb[0].mxu0 %v1005
        %v1176 = vpop.f32.mrb[0].mxu0
        %v1177 = vadd.f32 0.0, %v1176
        %v1178 = vpop.f32.mrb[0].mxu0
        %1179 = vmatprep.mubr.f32.mxu0 0.0
        %1180 = vmatmul.mubr.f32.gmra.mrb[0].mxu0 %v1008
        %v1181 = vpop.f32.mrb[0].mxu0
        %v1182 = vadd.f32 0.0, %v1181
        %v1183 = vpop.f32.mrb[0].mxu0
        %1184 = vmatprep.mubr.f32.mxu0 0.0
        %1185 = vmatmul.mubr.f32.gmra.mrb[0].mxu0 %v1011
        %v1186 = vpop.f32.mrb[0].mxu0
        %v1187 = vadd.f32 0.0, %v1186
        %v1188 = vpop.f32.mrb[0].mxu0
        %1189 = vmatprep.mubr.f32.mxu0 0.0
        %1190 = vmatmul.mubr.f32.gmra.mrb[0].mxu0 %v1014
        %v1191 = vpop.f32.mrb[0].mxu0
        %v1192 = vadd.f32 0.0, %v1191
        %v1193 = vpop.f32.mrb[0].mxu0
        %1194 = vmatprep.mubr.f32.mxu0 0.0
        %1195 = vmatmul.mubr.f32.gmra.mrb[0].mxu0 %v1017
        %v1196 = vpop.f32.mrb[0].mxu0
        %v1197 = vadd.f32 0.0, %v1196
        %v1198 = vpop.f32.mrb[0].mxu0
        %1199 = vmatprep.mubr.f32.mxu0 0.0
        %1200 = vmatmul.mubr.f32.gmra.mrb[0].mxu0 %v1020
        %v1201 = vpop.f32.mrb[0].mxu0
        %v1202 = vadd.f32 0.0, %v1201
        %v1203 = vpop.f32.mrb[0].mxu0
        %1204 = vmatprep.mubr.f32.mxu0 0.0
        %1205 = vmatmul.mubr.f32.gmra.mrb[0].mxu0 %v1023
        %v1206 = vpop.f32.mrb[0].mxu0
        %v1207 = vadd.f32 0.0, %v1206
        %v1208 = vpop.f32.mrb[0].mxu0
        %1209 = vmatprep.mubr.f32.mxu0 0.0
        %1210 = vmatmul.mubr.f32.gmra.mrb[0].mxu0 %v1026
        %v1211 = vpop.f32.mrb[0].mxu0
        %v1212 = vadd.f32 0.0, %v1211
        %v1213 = vpop.f32.mrb[0].mxu0
        %1214 = vmatprep.mubr.f32.mxu0 0.0
        %1215 = vmatmul.mubr.f32.gmra.mrb[0].mxu0 %v1029
        %v1216 = vpop.f32.mrb[0].mxu0
        %v1217 = vadd.f32 0.0, %v1216
        %v1218 = vpop.f32.mrb[0].mxu0
        %1219 = vmatprep.mubr.f32.mxu0 0.0
        %1220 = vmatmul.mubr.f32.gmra.mrb[0].mxu0 %v1032
        %v1221 = vpop.f32.mrb[0].mxu0
        %v1222 = vadd.f32 0.0, %v1221
        %v1223 = vpop.f32.mrb[0].mxu0
        %1224 = vmatprep.mubr.f32.mxu0 0.0
        %1225 = vmatmul.mubr.f32.gmra.mrb[0].mxu0 %v1035
        %v1226 = vpop.f32.mrb[0].mxu0
        %v1227 = vadd.f32 0.0, %v1226
        %v1228 = vpop.f32.mrb[0].mxu0
        %1229 = vmatprep.mubr.f32.mxu0 0.0
        %1230 = vmatmul.mubr.f32.gmra.mrb[0].mxu0 %v1038
        %v1231 = vpop.f32.mrb[0].mxu0
        %v1232 = vadd.f32 0.0, %v1231
        %v1233 = vpop.f32.mrb[0].mxu0
        %1234 = vmatprep.mubr.f32.mxu0 0.0
        %1235 = vmatmul.mubr.f32.gmra.mrb[0].mxu0 %v1041
        %v1236 = vpop.f32.mrb[0].mxu0
        %v1237 = vadd.f32 0.0, %v1236
        %v1238 = vpop.f32.mrb[0].mxu0
        %1239 = vmatprep.mubr.f32.mxu0 0.0
        %1240 = vmatmul.mubr.f32.gmra.mrb[0].mxu0 %v1044
        %v1241 = vpop.f32.mrb[0].mxu0
        %v1242 = vadd.f32 0.0, %v1241
        %v1243 = vpop.f32.mrb[0].mxu0
        %1244 = vmatprep.mubr.f32.mxu0 0.0
        %1245 = vmatmul.mubr.f32.gmra.mrb[0].mxu0 %v1047
        %v1246 = vpop.f32.mrb[0].mxu0
        %v1247 = vadd.f32 0.0, %v1246
        %v1248 = vpop.f32.mrb[0].mxu0
        %1249 = vmatprep.mubr.f32.mxu0 0.0
        %1250 = vmatmul.mubr.f32.gmra.mrb[0].mxu0 %v1050
        %v1251 = vpop.f32.mrb[0].mxu0
        %v1252 = vadd.f32 0.0, %v1251
        %v1253 = vpop.f32.mrb[0].mxu0
        %1254 = vmatprep.mubr.f32.mxu0 0.0
        %1255 = vmatmul.mubr.f32.gmra.mrb[0].mxu0 %v1053
        %v1256 = vpop.f32.mrb[0].mxu0
        %v1257 = vadd.f32 0.0, %v1256
        %v1258 = vpop.f32.mrb[0].mxu0
        %1259 = vmatprep.mubr.f32.mxu0 0.0
        %1260 = vmatmul.mubr.f32.gmra.mrb[0].mxu0 %v1056
        %v1261 = vpop.f32.mrb[0].mxu0
        %v1262 = vadd.f32 0.0, %v1261
        %v1263 = vpop.f32.mrb[0].mxu0
        %1264 = vmatprep.mubr.f32.mxu0 0.0
        %1265 = vmatmul.mubr.f32.gmra.mrb[0].mxu0 %v1059
        %v1266 = vpop.f32.mrb[0].mxu0
        %v1267 = vadd.f32 0.0, %v1266
        %v1268 = vpop.f32.mrb[0].mxu0
        %1269 = vmatprep.mubr.f32.mxu0 0.0
        %1270 = vmatmul.mubr.f32.gmra.mrb[0].mxu0 %v1062
        %v1271 = vpop.f32.mrb[0].mxu0
        %v1272 = vadd.f32 0.0, %v1271
        %v1273 = vpop.f32.mrb[0].mxu0
        %1274 = vmatprep.mubr.f32.mxu0 0.0
        %1275 = vmatmul.mubr.f32.gmra.mrb[0].mxu0 %v1065
        %v1276 = vpop.f32.mrb[0].mxu0
        %v1277 = vadd.f32 0.0, %v1276
        %v1278 = vpop.f32.mrb[0].mxu0
        %1279 = vmatprep.mubr.f32.mxu0 0.0
        %1280 = vmatmul.mubr.f32.gmra.mrb[0].mxu0 %v1068
        %v1281 = vpop.f32.mrb[0].mxu0
        %v1282 = vadd.f32 0.0, %v1281
        %v1283 = vpop.f32.mrb[0].mxu0
        %1284 = vmatprep.mubr.f32.mxu0 0.0
        %1285 = vmatmul.mubr.f32.gmra.mrb[0].mxu0 %v1071
        %v1286 = vpop.f32.mrb[0].mxu0
        %v1287 = vadd.f32 0.0, %v1286
        %v1288 = vpop.f32.mrb[0].mxu0
        %1289 = vmatprep.mubr.f32.mxu0 0.0
        %1290 = vmatmul.mubr.f32.gmra.mrb[0].mxu0 %v1074
        %v1291 = vpop.f32.mrb[0].mxu0
        %v1292 = vadd.f32 0.0, %v1291
        %v1293 = vpop.f32.mrb[0].mxu0
        %1294 = vmatprep.mubr.f32.mxu0 0.0
        %1295 = vmatmul.mubr.f32.gmra.mrb[0].mxu0 %v1077
        %v1296 = vpop.f32.mrb[0].mxu0
        %v1297 = vadd.f32 0.0, %v1296
        %v1298 = vpop.f32.mrb[0].mxu0
        %1299 = vmatprep.mubr.f32.mxu0 0.0
        %1300 = vmatmul.mubr.f32.gmra.mrb[0].mxu0 %v1080
        %v1301 = vpop.f32.mrb[0].mxu0
        %v1302 = vadd.f32 0.0, %v1301
        %v1303 = vpop.f32.mrb[0].mxu0
        %1304 = vmatprep.mubr.f32.mxu0 0.0
        %1305 = vmatmul.mubr.f32.gmra.mrb[0].mxu0 %v1083
        %v1306 = vpop.f32.mrb[0].mxu0
        %v1307 = vadd.f32 0.0, %v1306
        %v1308 = vpop.f32.mrb[0].mxu0
        %1309 = vmatprep.mubr.f32.mxu0 0.0
        %1310 = vmatmul.mubr.f32.gmra.mrb[0].mxu0 %v1086
        %v1311 = vpop.f32.mrb[0].mxu0
        %v1312 = vadd.f32 0.0, %v1311
        %v1313 = vpop.f32.mrb[0].mxu0
        %1314 = vmatprep.mubr.f32.mxu0 0.0
        %1315 = vmatmul.mubr.f32.gmra.mrb[0].mxu0 %v1089
        %v1316 = vpop.f32.mrb[0].mxu0
        %v1317 = vadd.f32 0.0, %v1316
        %v1318 = vpop.f32.mrb[0].mxu0
        %1319 = vmatprep.mubr.f32.mxu0 0.0
        %1320 = vmatmul.mubr.f32.gmra.mrb[0].mxu0 %v1092
        %v1321 = vpop.f32.mrb[0].mxu0
        %v1322 = vadd.f32 0.0, %v1321
        %v1323 = vpop.f32.mrb[0].mxu0
        %1324 = vmatprep.mubr.f32.mxu0 0.0
        %1325 = vmatmul.mubr.f32.gmra.mrb[0].mxu0 %v1095
        %v1326 = vpop.f32.mrb[0].mxu0
        %v1327 = vadd.f32 0.0, %v1326
        %v1328 = vpop.f32.mrb[0].mxu0
        %1329 = vmatprep.mubr.f32.mxu0 0.0
        %1330 = vmatmul.mubr.f32.gmra.mrb[0].mxu0 %v1098
        %v1331 = vpop.f32.mrb[0].mxu0
        %v1332 = vadd.f32 0.0, %v1331
        %v1333 = vpop.f32.mrb[0].mxu0
        %1334 = vmatprep.mubr.f32.mxu0 0.0
        %1335 = vmatmul.mubr.f32.gmra.mrb[0].mxu0 %v1101
        %v1336 = vpop.f32.mrb[0].mxu0
        %v1337 = vadd.f32 0.0, %v1336
        %v1338 = vpop.f32.mrb[0].mxu0
        %1339 = vmatprep.mubr.f32.mxu0 0.0
        %1340 = vmatmul.mubr.f32.gmra.mrb[0].mxu0 %v1104
        %v1341 = vpop.f32.mrb[0].mxu0
        %v1342 = vadd.f32 0.0, %v1341
        %v1343 = vpop.f32.mrb[0].mxu0
        %1344 = vdwg.mxu0
        %v1345 = vadd.f32 %v830, %v1177
        %v1346 = vadd.f32 %v835, %v1182
        %v1347 = vadd.f32 %v840, %v1187
        %v1348 = vadd.f32 %v845, %v1192
        %v1349 = vadd.f32 %v850, %v1197
        %v1350 = vadd.f32 %v855, %v1202
        %v1351 = vadd.f32 %v860, %v1207
        %v1352 = vadd.f32 %v865, %v1212
        %v1353 = vadd.f32 %v870, %v1217
        %v1354 = vadd.f32 %v875, %v1222
        %v1355 = vadd.f32 %v880, %v1227
        %v1356 = vadd.f32 %v885, %v1232
        %v1357 = vadd.f32 %v890, %v1237
        %v1358 = vadd.f32 %v895, %v1242
        %v1359 = vadd.f32 %v900, %v1247
        %v1360 = vadd.f32 %v905, %v1252
        %v1361 = vadd.f32 %v910, %v1257
        %v1362 = vadd.f32 %v915, %v1262
        %v1363 = vadd.f32 %v920, %v1267
        %v1364 = vadd.f32 %v925, %v1272
        %v1365 = vadd.f32 %v930, %v1277
        %v1366 = vadd.f32 %v935, %v1282
        %v1367 = vadd.f32 %v940, %v1287
        %v1368 = vadd.f32 %v945, %v1292
        %v1369 = vadd.f32 %v950, %v1297
        %v1370 = vadd.f32 %v955, %v1302
        %v1371 = vadd.f32 %v960, %v1307
        %v1372 = vadd.f32 %v965, %v1312
        %v1373 = vadd.f32 %v970, %v1317
        %v1374 = vadd.f32 %v975, %v1322
        %v1375 = vadd.f32 %v980, %v1327
        %v1376 = vadd.f32 %v985, %v1332
        %v1377 = vadd.f32 %v990, %v1337
        %v1378 = vadd.f32 %v995, %v1342
        %1379 = vrot.lane.b32.xlu0 %v205, 64
        %v1380 = vpop.permute.xlu0 %1379
        %1381 = vrot.lane.b32.xlu0 %v207, 64
        %v1382 = vpop.permute.xlu0 %1381
        %1383 = vrot.lane.b32.xlu0 %v209, 64
        %v1384 = vpop.permute.xlu0 %1383
        %1385 = vrot.lane.b32.xlu0 %v211, 64
        %v1386 = vpop.permute.xlu0 %1385
        %1387 = vrot.lane.b32.xlu0 %v213, 64
        %v1388 = vpop.permute.xlu0 %1387
        %1389 = vrot.lane.b32.xlu0 %v215, 64
        %v1390 = vpop.permute.xlu0 %1389
        %1391 = vrot.lane.b32.xlu0 %v217, 64
        %v1392 = vpop.permute.xlu0 %1391
        %1393 = vrot.lane.b32.xlu0 %v219, 64
        %v1394 = vpop.permute.xlu0 %1393
        %1395 = vrot.lane.b32.xlu0 %v221, 64
        %v1396 = vpop.permute.xlu0 %1395
        %1397 = vrot.lane.b32.xlu0 %v223, 64
        %v1398 = vpop.permute.xlu0 %1397
        %1399 = vrot.lane.b32.xlu0 %v225, 64
        %v1400 = vpop.permute.xlu0 %1399
        %1401 = vrot.lane.b32.xlu0 %v227, 64
        %v1402 = vpop.permute.xlu0 %1401
        %1403 = vrot.lane.b32.xlu0 %v229, 64
        %v1404 = vpop.permute.xlu0 %1403
        %1405 = vrot.lane.b32.xlu0 %v231, 64
        %v1406 = vpop.permute.xlu0 %1405
        %1407 = vrot.lane.b32.xlu0 %v233, 64
        %v1408 = vpop.permute.xlu0 %1407
        %1409 = vrot.lane.b32.xlu0 %v235, 64
        %v1410 = vpop.permute.xlu0 %1409
        %1411 = vrot.lane.b32.xlu0 %v237, 64
        %v1412 = vpop.permute.xlu0 %1411
        %1413 = vrot.lane.b32.xlu0 %v239, 64
        %v1414 = vpop.permute.xlu0 %1413
        %1415 = vrot.lane.b32.xlu0 %v241, 64
        %v1416 = vpop.permute.xlu0 %1415
        %1417 = vrot.lane.b32.xlu0 %v243, 64
        %v1418 = vpop.permute.xlu0 %1417
        %1419 = vrot.lane.b32.xlu0 %v245, 64
        %v1420 = vpop.permute.xlu0 %1419
        %1421 = vrot.lane.b32.xlu0 %v247, 64
        %v1422 = vpop.permute.xlu0 %1421
        %1423 = vrot.lane.b32.xlu0 %v249, 64
        %v1424 = vpop.permute.xlu0 %1423
        %1425 = vrot.lane.b32.xlu0 %v251, 64
        %v1426 = vpop.permute.xlu0 %1425
        %1427 = vrot.lane.b32.xlu0 %v253, 64
        %v1428 = vpop.permute.xlu0 %1427
        %1429 = vrot.lane.b32.xlu0 %v255, 64
        %v1430 = vpop.permute.xlu0 %1429
        %1431 = vrot.lane.b32.xlu0 %v257, 64
        %v1432 = vpop.permute.xlu0 %1431
        %1433 = vrot.lane.b32.xlu0 %v259, 64
        %v1434 = vpop.permute.xlu0 %1433
        %1435 = vrot.lane.b32.xlu0 %v261, 64
        %v1436 = vpop.permute.xlu0 %1435
        %1437 = vrot.lane.b32.xlu0 %v263, 64
        %v1438 = vpop.permute.xlu0 %1437
        %1439 = vrot.lane.b32.xlu0 %v265, 64
        %v1440 = vpop.permute.xlu0 %1439
        %1441 = vrot.lane.b32.xlu0 %v267, 64
        %v1442 = vpop.permute.xlu0 %1441
        %1443 = vrot.lane.b32.xlu0 %v269, 64
        %v1444 = vpop.permute.xlu0 %1443
        %1445 = vrot.lane.b32.xlu0 %v271, 64
        %v1446 = vpop.permute.xlu0 %1445
        %vm1447 = vcmask 1044480
        %v1448 = vrot.slane %v201, 3
        %v1449 = vrot.slane %v202, 3
        %v1450 = vsel %vm1447, %v1448, %v1449
        %v1451 = vrot.slane %v203, 3
        %v1452 = vsel %vm1447, %v1449, %v1451
        %v1453 = vsel %vm383, %v1380, 0
        %v1455 = vsel %vm383, %v1382, 0
        %v1457 = vsel %vm383, %v1384, 0
        %v1459 = vsel %vm383, %v1386, 0
        %v1461 = vsel %vm383, %v1388, 0
        %v1463 = vsel %vm383, %v1390, 0
        %v1465 = vsel %vm383, %v1392, 0
        %v1467 = vsel %vm383, %v1394, 0
        %v1469 = vsel %vm383, %v1396, 0
        %v1471 = vsel %vm383, %v1398, 0
        %v1473 = vsel %vm383, %v1400, 0
        %v1475 = vsel %vm383, %v1402, 0
        %v1477 = vsel %vm383, %v1404, 0
        %v1479 = vsel %vm383, %v1406, 0
        %v1481 = vsel %vm383, %v1408, 0
        %v1483 = vsel %vm383, %v1410, 0
        %v1485 = vsel %vm383, %v1412, 0
        %v1487 = vsel %vm383, %v1414, 0
        %v1489 = vsel %vm383, %v1416, 0
        %v1491 = vsel %vm383, %v1418, 0
        %v1493 = vsel %vm383, %v1420, 0
        %v1495 = vsel %vm383, %v1422, 0
        %v1497 = vsel %vm383, %v1424, 0
        %v1499 = vsel %vm383, %v1426, 0
        %v1501 = vsel %vm383, %v1428, 0
        %v1503 = vsel %vm383, %v1430, 0
        %v1505 = vsel %vm383, %v1432, 0
        %v1507 = vsel %vm383, %v1434, 0
        %v1509 = vsel %vm383, %v1436, 0
        %v1511 = vsel %vm383, %v1438, 0
        %v1513 = vsel %vm383, %v1440, 0
        %v1515 = vsel %vm383, %v1442, 0
        %v1517 = vsel %vm383, %v1444, 0
        %v1519 = vsel %vm383, %v1446, 0
        %v1521 = vsel %vm383, %v1450, 0
        %v1523 = vsel %vm383, %v1452, 0
        %1525 = vmatprep.subr.mxu0 0.0
        %1526 = vmatpush1.xpose.msra.mxu0 %v1521
        %1527 = vmatprep.subr.mxu0 0.0
        %1528 = vmatpush1.xpose.msra.mxu0 %v1523
        %1529 = vmatprep.subr.mxu0 0.0
        %1530 = vmatpush1.xpose.msra.mxu0 0.0
        %1531 = vmatprep.subr.mxu0 0.0
        %1532 = vmatpush1.xpose.msra.mxu0 0.0
        %1533 = vmatprep.subr.mxu0 0.0
        %1534 = vmatpush1.xpose.msra.mxu0 0.0
        %1535 = vmatprep.subr.mxu0 0.0
        %1536 = vmatpush1.xpose.msra.mxu0 0.0
        %1537 = vmatprep.subr.mxu0 0.0
        %1538 = vmatpush1.xpose.msra.mxu0 0.0
        %1539 = vmatprep.subr.mxu0 0.0
        %1540 = vmatpush1.xpose.msra.mxu0 0.0
        %1541 = vmatprep.subr.mxu0 0.0
        %1542 = vmatpush1.xpose.msra.mxu0 0.0
        %1543 = vmatprep.subr.mxu0 0.0
        %1544 = vmatpush1.xpose.msra.mxu0 0.0
        %1545 = vmatprep.subr.mxu0 0.0
        %1546 = vmatpush1.xpose.msra.mxu0 0.0
        %1547 = vmatprep.subr.mxu0 0.0
        %1548 = vmatpush1.xpose.msra.mxu0 0.0
        %1549 = vmatprep.subr.mxu0 0.0
        %1550 = vmatpush1.xpose.msra.mxu0 0.0
        %1551 = vmatprep.subr.mxu0 0.0
        %1552 = vmatpush1.xpose.msra.mxu0 0.0
        %1553 = vmatprep.subr.mxu0 0.0
        %1554 = vmatpush1.xpose.msra.mxu0 0.0
        %1555 = vmatprep.subr.mxu0 0.0
        %1556 = vmatpush1.xpose.msra.mxu0 0.0
        %1557 = vmatprep.subr.mxu0 0.0
        %1558 = vmatpush1.xpose.msra.mxu0 0.0
        %1559 = vmatprep.subr.mxu0 0.0
        %1560 = vmatpush1.xpose.msra.mxu0 0.0
        %1561 = vmatprep.subr.mxu0 0.0
        %1562 = vmatpush1.xpose.msra.mxu0 0.0
        %1563 = vmatprep.subr.mxu0 0.0
        %1564 = vmatpush1.xpose.msra.mxu0 0.0
        %1565 = vmatprep.subr.mxu0 0.0
        %1566 = vmatpush1.xpose.msra.mxu0 0.0
        %1567 = vmatprep.subr.mxu0 0.0
        %1568 = vmatpush1.xpose.msra.mxu0 0.0
        %1569 = vmatprep.subr.mxu0 0.0
        %1570 = vmatpush1.xpose.msra.mxu0 0.0
        %1571 = vmatprep.subr.mxu0 0.0
        %1572 = vmatpush1.xpose.msra.mxu0 0.0
        %1573 = vmatprep.subr.mxu0 0.0
        %1574 = vmatpush1.xpose.msra.mxu0 0.0
        %1575 = vmatprep.subr.mxu0 0.0
        %1576 = vmatpush1.xpose.msra.mxu0 0.0
        %1577 = vmatprep.subr.mxu0 0.0
        %1578 = vmatpush1.xpose.msra.mxu0 0.0
        %1579 = vmatprep.subr.mxu0 0.0
        %1580 = vmatpush1.xpose.msra.mxu0 0.0
        %1581 = vmatprep.subr.mxu0 0.0
        %1582 = vmatpush1.xpose.msra.mxu0 0.0
        %1583 = vmatprep.subr.mxu0 0.0
        %1584 = vmatpush1.xpose.msra.mxu0 0.0
        %1585 = vmatprep.subr.mxu0 0.0
        %1586 = vmatpush1.xpose.msra.mxu0 0.0
        %1587 = vmatprep.subr.mxu0 0.0
        %1588 = vmatpush1.xpose.msra.mxu0 0.0
        %1589 = vmatprep.mubr.f32.mxu0 0.0
        %1590 = vmatmul.mubr.f32.gmra.mrb[0].mxu0 %v1453
        %v1591 = vpop.f32.mrb[0].mxu0
        %v1592 = vadd.f32 0.0, %v1591
        %v1593 = vpop.f32.mrb[0].mxu0
        %1594 = vmatprep.mubr.f32.mxu0 0.0
        %1595 = vmatmul.mubr.f32.gmra.mrb[0].mxu0 %v1455
        %v1596 = vpop.f32.mrb[0].mxu0
        %v1597 = vadd.f32 0.0, %v1596
        %v1598 = vpop.f32.mrb[0].mxu0
        %1599 = vmatprep.mubr.f32.mxu0 0.0
        %1600 = vmatmul.mubr.f32.gmra.mrb[0].mxu0 %v1457
        %v1601 = vpop.f32.mrb[0].mxu0
        %v1602 = vadd.f32 0.0, %v1601
        %v1603 = vpop.f32.mrb[0].mxu0
        %1604 = vmatprep.mubr.f32.mxu0 0.0
        %1605 = vmatmul.mubr.f32.gmra.mrb[0].mxu0 %v1459
        %v1606 = vpop.f32.mrb[0].mxu0
        %v1607 = vadd.f32 0.0, %v1606
        %v1608 = vpop.f32.mrb[0].mxu0
        %1609 = vmatprep.mubr.f32.mxu0 0.0
        %1610 = vmatmul.mubr.f32.gmra.mrb[0].mxu0 %v1461
        %v1611 = vpop.f32.mrb[0].mxu0
        %v1612 = vadd.f32 0.0, %v1611
        %v1613 = vpop.f32.mrb[0].mxu0
        %1614 = vmatprep.mubr.f32.mxu0 0.0
        %1615 = vmatmul.mubr.f32.gmra.mrb[0].mxu0 %v1463
        %v1616 = vpop.f32.mrb[0].mxu0
        %v1617 = vadd.f32 0.0, %v1616
        %v1618 = vpop.f32.mrb[0].mxu0
        %1619 = vmatprep.mubr.f32.mxu0 0.0
        %1620 = vmatmul.mubr.f32.gmra.mrb[0].mxu0 %v1465
        %v1621 = vpop.f32.mrb[0].mxu0
        %v1622 = vadd.f32 0.0, %v1621
        %v1623 = vpop.f32.mrb[0].mxu0
        %1624 = vmatprep.mubr.f32.mxu0 0.0
        %1625 = vmatmul.mubr.f32.gmra.mrb[0].mxu0 %v1467
        %v1626 = vpop.f32.mrb[0].mxu0
        %v1627 = vadd.f32 0.0, %v1626
        %v1628 = vpop.f32.mrb[0].mxu0
        %1629 = vmatprep.mubr.f32.mxu0 0.0
        %1630 = vmatmul.mubr.f32.gmra.mrb[0].mxu0 %v1469
        %v1631 = vpop.f32.mrb[0].mxu0
        %v1632 = vadd.f32 0.0, %v1631
        %v1633 = vpop.f32.mrb[0].mxu0
        %1634 = vmatprep.mubr.f32.mxu0 0.0
        %1635 = vmatmul.mubr.f32.gmra.mrb[0].mxu0 %v1471
        %v1636 = vpop.f32.mrb[0].mxu0
        %v1637 = vadd.f32 0.0, %v1636
        %v1638 = vpop.f32.mrb[0].mxu0
        %1639 = vmatprep.mubr.f32.mxu0 0.0
        %1640 = vmatmul.mubr.f32.gmra.mrb[0].mxu0 %v1473
        %v1641 = vpop.f32.mrb[0].mxu0
        %v1642 = vadd.f32 0.0, %v1641
        %v1643 = vpop.f32.mrb[0].mxu0
        %1644 = vmatprep.mubr.f32.mxu0 0.0
        %1645 = vmatmul.mubr.f32.gmra.mrb[0].mxu0 %v1475
        %v1646 = vpop.f32.mrb[0].mxu0
        %v1647 = vadd.f32 0.0, %v1646
        %v1648 = vpop.f32.mrb[0].mxu0
        %1649 = vmatprep.mubr.f32.mxu0 0.0
        %1650 = vmatmul.mubr.f32.gmra.mrb[0].mxu0 %v1477
        %v1651 = vpop.f32.mrb[0].mxu0
        %v1652 = vadd.f32 0.0, %v1651
        %v1653 = vpop.f32.mrb[0].mxu0
        %1654 = vmatprep.mubr.f32.mxu0 0.0
        %1655 = vmatmul.mubr.f32.gmra.mrb[0].mxu0 %v1479
        %v1656 = vpop.f32.mrb[0].mxu0
        %v1657 = vadd.f32 0.0, %v1656
        %v1658 = vpop.f32.mrb[0].mxu0
        %1659 = vmatprep.mubr.f32.mxu0 0.0
        %1660 = vmatmul.mubr.f32.gmra.mrb[0].mxu0 %v1481
        %v1661 = vpop.f32.mrb[0].mxu0
        %v1662 = vadd.f32 0.0, %v1661
        %v1663 = vpop.f32.mrb[0].mxu0
        %1664 = vmatprep.mubr.f32.mxu0 0.0
        %1665 = vmatmul.mubr.f32.gmra.mrb[0].mxu0 %v1483
        %v1666 = vpop.f32.mrb[0].mxu0
        %v1667 = vadd.f32 0.0, %v1666
        %v1668 = vpop.f32.mrb[0].mxu0
        %1669 = vmatprep.mubr.f32.mxu0 0.0
        %1670 = vmatmul.mubr.f32.gmra.mrb[0].mxu0 %v1485
        %v1671 = vpop.f32.mrb[0].mxu0
        %v1672 = vadd.f32 0.0, %v1671
        %v1673 = vpop.f32.mrb[0].mxu0
        %1674 = vmatprep.mubr.f32.mxu0 0.0
        %1675 = vmatmul.mubr.f32.gmra.mrb[0].mxu0 %v1487
        %v1676 = vpop.f32.mrb[0].mxu0
        %v1677 = vadd.f32 0.0, %v1676
        %v1678 = vpop.f32.mrb[0].mxu0
        %1679 = vmatprep.mubr.f32.mxu0 0.0
        %1680 = vmatmul.mubr.f32.gmra.mrb[0].mxu0 %v1489
        %v1681 = vpop.f32.mrb[0].mxu0
        %v1682 = vadd.f32 0.0, %v1681
        %v1683 = vpop.f32.mrb[0].mxu0
        %1684 = vmatprep.mubr.f32.mxu0 0.0
        %1685 = vmatmul.mubr.f32.gmra.mrb[0].mxu0 %v1491
        %v1686 = vpop.f32.mrb[0].mxu0
        %v1687 = vadd.f32 0.0, %v1686
        %v1688 = vpop.f32.mrb[0].mxu0
        %1689 = vmatprep.mubr.f32.mxu0 0.0
        %1690 = vmatmul.mubr.f32.gmra.mrb[0].mxu0 %v1493
        %v1691 = vpop.f32.mrb[0].mxu0
        %v1692 = vadd.f32 0.0, %v1691
        %v1693 = vpop.f32.mrb[0].mxu0
        %1694 = vmatprep.mubr.f32.mxu0 0.0
        %1695 = vmatmul.mubr.f32.gmra.mrb[0].mxu0 %v1495
        %v1696 = vpop.f32.mrb[0].mxu0
        %v1697 = vadd.f32 0.0, %v1696
        %v1698 = vpop.f32.mrb[0].mxu0
        %1699 = vmatprep.mubr.f32.mxu0 0.0
        %1700 = vmatmul.mubr.f32.gmra.mrb[0].mxu0 %v1497
        %v1701 = vpop.f32.mrb[0].mxu0
        %v1702 = vadd.f32 0.0, %v1701
        %v1703 = vpop.f32.mrb[0].mxu0
        %1704 = vmatprep.mubr.f32.mxu0 0.0
        %1705 = vmatmul.mubr.f32.gmra.mrb[0].mxu0 %v1499
        %v1706 = vpop.f32.mrb[0].mxu0
        %v1707 = vadd.f32 0.0, %v1706
        %v1708 = vpop.f32.mrb[0].mxu0
        %1709 = vmatprep.mubr.f32.mxu0 0.0
        %1710 = vmatmul.mubr.f32.gmra.mrb[0].mxu0 %v1501
        %v1711 = vpop.f32.mrb[0].mxu0
        %v1712 = vadd.f32 0.0, %v1711
        %v1713 = vpop.f32.mrb[0].mxu0
        %1714 = vmatprep.mubr.f32.mxu0 0.0
        %1715 = vmatmul.mubr.f32.gmra.mrb[0].mxu0 %v1503
        %v1716 = vpop.f32.mrb[0].mxu0
        %v1717 = vadd.f32 0.0, %v1716
        %v1718 = vpop.f32.mrb[0].mxu0
        %1719 = vmatprep.mubr.f32.mxu0 0.0
        %1720 = vmatmul.mubr.f32.gmra.mrb[0].mxu0 %v1505
        %v1721 = vpop.f32.mrb[0].mxu0
        %v1722 = vadd.f32 0.0, %v1721
        %v1723 = vpop.f32.mrb[0].mxu0
        %1724 = vmatprep.mubr.f32.mxu0 0.0
        %1725 = vmatmul.mubr.f32.gmra.mrb[0].mxu0 %v1507
        %v1726 = vpop.f32.mrb[0].mxu0
        %v1727 = vadd.f32 0.0, %v1726
        %v1728 = vpop.f32.mrb[0].mxu0
        %1729 = vmatprep.mubr.f32.mxu0 0.0
        %1730 = vmatmul.mubr.f32.gmra.mrb[0].mxu0 %v1509
        %v1731 = vpop.f32.mrb[0].mxu0
        %v1732 = vadd.f32 0.0, %v1731
        %v1733 = vpop.f32.mrb[0].mxu0
        %1734 = vmatprep.mubr.f32.mxu0 0.0
        %1735 = vmatmul.mubr.f32.gmra.mrb[0].mxu0 %v1511
        %v1736 = vpop.f32.mrb[0].mxu0
        %v1737 = vadd.f32 0.0, %v1736
        %v1738 = vpop.f32.mrb[0].mxu0
        %1739 = vmatprep.mubr.f32.mxu0 0.0
        %1740 = vmatmul.mubr.f32.gmra.mrb[0].mxu0 %v1513
        %v1741 = vpop.f32.mrb[0].mxu0
        %v1742 = vadd.f32 0.0, %v1741
        %v1743 = vpop.f32.mrb[0].mxu0
        %1744 = vmatprep.mubr.f32.mxu0 0.0
        %1745 = vmatmul.mubr.f32.gmra.mrb[0].mxu0 %v1515
        %v1746 = vpop.f32.mrb[0].mxu0
        %v1747 = vadd.f32 0.0, %v1746
        %v1748 = vpop.f32.mrb[0].mxu0
        %1749 = vmatprep.mubr.f32.mxu0 0.0
        %1750 = vmatmul.mubr.f32.gmra.mrb[0].mxu0 %v1517
        %v1751 = vpop.f32.mrb[0].mxu0
        %v1752 = vadd.f32 0.0, %v1751
        %v1753 = vpop.f32.mrb[0].mxu0
        %1754 = vmatprep.mubr.f32.mxu0 0.0
        %1755 = vmatmul.mubr.f32.gmra.mrb[0].mxu0 %v1519
        %v1756 = vpop.f32.mrb[0].mxu0
        %v1757 = vadd.f32 0.0, %v1756
        %v1758 = vpop.f32.mrb[0].mxu0
        %1759 = vdwg.mxu0
        %v1760 = vadd.f32 %v1345, %v1592
        %v1761 = vadd.f32 %v1346, %v1597
        %v1762 = vadd.f32 %v1347, %v1602
        %v1763 = vadd.f32 %v1348, %v1607
        %v1764 = vadd.f32 %v1349, %v1612
        %v1765 = vadd.f32 %v1350, %v1617
        %v1766 = vadd.f32 %v1351, %v1622
        %v1767 = vadd.f32 %v1352, %v1627
        %v1768 = vadd.f32 %v1353, %v1632
        %v1769 = vadd.f32 %v1354, %v1637
        %v1770 = vadd.f32 %v1355, %v1642
        %v1771 = vadd.f32 %v1356, %v1647
        %v1772 = vadd.f32 %v1357, %v1652
        %v1773 = vadd.f32 %v1358, %v1657
        %v1774 = vadd.f32 %v1359, %v1662
        %v1775 = vadd.f32 %v1360, %v1667
        %v1776 = vadd.f32 %v1361, %v1672
        %v1777 = vadd.f32 %v1362, %v1677
        %v1778 = vadd.f32 %v1363, %v1682
        %v1779 = vadd.f32 %v1364, %v1687
        %v1780 = vadd.f32 %v1365, %v1692
        %v1781 = vadd.f32 %v1366, %v1697
        %v1782 = vadd.f32 %v1367, %v1702
        %v1783 = vadd.f32 %v1368, %v1707
        %v1784 = vadd.f32 %v1369, %v1712
        %v1785 = vadd.f32 %v1370, %v1717
        %v1786 = vadd.f32 %v1371, %v1722
        %v1787 = vadd.f32 %v1372, %v1727
        %v1788 = vadd.f32 %v1373, %v1732
        %v1789 = vadd.f32 %v1374, %v1737
        %v1790 = vadd.f32 %v1375, %v1742
        %v1791 = vadd.f32 %v1376, %v1747
        %v1792 = vadd.f32 %v1377, %v1752
        %v1793 = vadd.f32 %v1378, %v1757
        %v1794 = vmul.f32 %v1760, %v1760
        %v1795 = vmul.f32 %v1761, %v1761
        %v1796 = vmul.f32 %v1762, %v1762
        %v1797 = vmul.f32 %v1763, %v1763
        %v1798 = vmul.f32 %v1764, %v1764
        %v1799 = vmul.f32 %v1765, %v1765
        %v1800 = vmul.f32 %v1766, %v1766
        %v1801 = vmul.f32 %v1767, %v1767
        %v1802 = vmul.f32 %v1768, %v1768
        %v1803 = vmul.f32 %v1769, %v1769
        %v1804 = vmul.f32 %v1770, %v1770
        %v1805 = vmul.f32 %v1771, %v1771
        %v1806 = vmul.f32 %v1772, %v1772
        %v1807 = vmul.f32 %v1773, %v1773
        %v1808 = vmul.f32 %v1774, %v1774
        %v1809 = vmul.f32 %v1775, %v1775
        %v1810 = vmul.f32 %v1776, %v1776
        %v1811 = vmul.f32 %v1777, %v1777
        %v1812 = vmul.f32 %v1778, %v1778
        %v1813 = vmul.f32 %v1779, %v1779
        %v1814 = vmul.f32 %v1780, %v1780
        %v1815 = vmul.f32 %v1781, %v1781
        %v1816 = vmul.f32 %v1782, %v1782
        %v1817 = vmul.f32 %v1783, %v1783
        %v1818 = vmul.f32 %v1784, %v1784
        %v1819 = vmul.f32 %v1785, %v1785
        %v1820 = vmul.f32 %v1786, %v1786
        %v1821 = vmul.f32 %v1787, %v1787
        %v1822 = vmul.f32 %v1788, %v1788
        %v1823 = vmul.f32 %v1789, %v1789
        %v1824 = vmul.f32 %v1790, %v1790
        %v1825 = vmul.f32 %v1791, %v1791
        %v1826 = vmul.f32 %v1792, %v1792
        %v1827 = vmul.f32 %v1793, %v1793
        %v1828 = vadd.f32 %v1794, %v1811
        %v1829 = vadd.f32 %v1795, %v1812
        %v1830 = vadd.f32 %v1796, %v1813
        %v1831 = vadd.f32 %v1797, %v1814
        %v1832 = vadd.f32 %v1798, %v1815
        %v1833 = vadd.f32 %v1799, %v1816
        %v1834 = vadd.f32 %v1800, %v1817
        %v1835 = vadd.f32 %v1801, %v1818
        %v1836 = vadd.f32 %v1802, %v1819
        %v1837 = vadd.f32 %v1803, %v1820
        %v1838 = vadd.f32 %v1804, %v1821
        %v1839 = vadd.f32 %v1805, %v1822
        %v1840 = vadd.f32 %v1806, %v1823
        %v1841 = vadd.f32 %v1807, %v1824
        %v1842 = vadd.f32 %v1808, %v1825
        %v1843 = vadd.f32 %v1809, %v1826
        %v1844 = vadd.f32 %v1810, %v1827
        %v1845 = vadd.f32 %v1828, 1e-06
        %v1846 = vadd.f32 %v1829, 1e-06
        %v1847 = vadd.f32 %v1830, 1e-06
        %v1848 = vadd.f32 %v1831, 1e-06
        %v1849 = vadd.f32 %v1832, 1e-06
        %v1850 = vadd.f32 %v1833, 1e-06
        %v1851 = vadd.f32 %v1834, 1e-06
        %v1852 = vadd.f32 %v1835, 1e-06
        %v1853 = vadd.f32 %v1836, 1e-06
        %v1854 = vadd.f32 %v1837, 1e-06
        %v1855 = vadd.f32 %v1838, 1e-06
        %v1856 = vadd.f32 %v1839, 1e-06
        %v1857 = vadd.f32 %v1840, 1e-06
        %v1858 = vadd.f32 %v1841, 1e-06
        %v1859 = vadd.f32 %v1842, 1e-06
        %v1860 = vadd.f32 %v1843, 1e-06
        %v1861 = vadd.f32 %v1844, 1e-06
        %v1862 = vrsqrt.pop %v1845
        %v1863 = vmul.f32 %v1845, %v1862
        %vm1864 = vcmp.eq.f32.partialorder %v1845, inf
        %v1865 = vsel %vm1864, %v1845, %v1863
        %vm1866 = vcmp.eq.f32.partialorder %v1845, 0.0
        %v1867 = vand.u32 %v1845, 2147483648
        %v1868 = vsel %vm1866, %v1867, %v1865
        %v1869 = vrsqrt.pop %v1846
        %v1870 = vmul.f32 %v1846, %v1869
        %vm1871 = vcmp.eq.f32.partialorder %v1846, inf
        %v1872 = vsel %vm1871, %v1846, %v1870
        %vm1873 = vcmp.eq.f32.partialorder %v1846, 0.0
        %v1874 = vand.u32 %v1846, 2147483648
        %v1875 = vsel %vm1873, %v1874, %v1872
        %v1876 = vrsqrt.pop %v1847
        %v1877 = vmul.f32 %v1847, %v1876
        %vm1878 = vcmp.eq.f32.partialorder %v1847, inf
        %v1879 = vsel %vm1878, %v1847, %v1877
        %vm1880 = vcmp.eq.f32.partialorder %v1847, 0.0
        %v1881 = vand.u32 %v1847, 2147483648
        %v1882 = vsel %vm1880, %v1881, %v1879
        %v1883 = vrsqrt.pop %v1848
        %v1884 = vmul.f32 %v1848, %v1883
        %vm1885 = vcmp.eq.f32.partialorder %v1848, inf
        %v1886 = vsel %vm1885, %v1848, %v1884
        %vm1887 = vcmp.eq.f32.partialorder %v1848, 0.0
        %v1888 = vand.u32 %v1848, 2147483648
        %v1889 = vsel %vm1887, %v1888, %v1886
        %v1890 = vrsqrt.pop %v1849
        %v1891 = vmul.f32 %v1849, %v1890
        %vm1892 = vcmp.eq.f32.partialorder %v1849, inf
        %v1893 = vsel %vm1892, %v1849, %v1891
        %vm1894 = vcmp.eq.f32.partialorder %v1849, 0.0
        %v1895 = vand.u32 %v1849, 2147483648
        %v1896 = vsel %vm1894, %v1895, %v1893
        %v1897 = vrsqrt.pop %v1850
        %v1898 = vmul.f32 %v1850, %v1897
        %vm1899 = vcmp.eq.f32.partialorder %v1850, inf
        %v1900 = vsel %vm1899, %v1850, %v1898
        %vm1901 = vcmp.eq.f32.partialorder %v1850, 0.0
        %v1902 = vand.u32 %v1850, 2147483648
        %v1903 = vsel %vm1901, %v1902, %v1900
        %v1904 = vrsqrt.pop %v1851
        %v1905 = vmul.f32 %v1851, %v1904
        %vm1906 = vcmp.eq.f32.partialorder %v1851, inf
        %v1907 = vsel %vm1906, %v1851, %v1905
        %vm1908 = vcmp.eq.f32.partialorder %v1851, 0.0
        %v1909 = vand.u32 %v1851, 2147483648
        %v1910 = vsel %vm1908, %v1909, %v1907
        %v1911 = vrsqrt.pop %v1852
        %v1912 = vmul.f32 %v1852, %v1911
        %vm1913 = vcmp.eq.f32.partialorder %v1852, inf
        %v1914 = vsel %vm1913, %v1852, %v1912
        %vm1915 = vcmp.eq.f32.partialorder %v1852, 0.0
        %v1916 = vand.u32 %v1852, 2147483648
        %v1917 = vsel %vm1915, %v1916, %v1914
        %v1918 = vrsqrt.pop %v1853
        %v1919 = vmul.f32 %v1853, %v1918
        %vm1920 = vcmp.eq.f32.partialorder %v1853, inf
        %v1921 = vsel %vm1920, %v1853, %v1919
        %vm1922 = vcmp.eq.f32.partialorder %v1853, 0.0
        %v1923 = vand.u32 %v1853, 2147483648
        %v1924 = vsel %vm1922, %v1923, %v1921
        %v1925 = vrsqrt.pop %v1854
        %v1926 = vmul.f32 %v1854, %v1925
        %vm1927 = vcmp.eq.f32.partialorder %v1854, inf
        %v1928 = vsel %vm1927, %v1854, %v1926
        %vm1929 = vcmp.eq.f32.partialorder %v1854, 0.0
        %v1930 = vand.u32 %v1854, 2147483648
        %v1931 = vsel %vm1929, %v1930, %v1928
        %v1932 = vrsqrt.pop %v1855
        %v1933 = vmul.f32 %v1855, %v1932
        %vm1934 = vcmp.eq.f32.partialorder %v1855, inf
        %v1935 = vsel %vm1934, %v1855, %v1933
        %vm1936 = vcmp.eq.f32.partialorder %v1855, 0.0
        %v1937 = vand.u32 %v1855, 2147483648
        %v1938 = vsel %vm1936, %v1937, %v1935
        %v1939 = vrsqrt.pop %v1856
        %v1940 = vmul.f32 %v1856, %v1939
        %vm1941 = vcmp.eq.f32.partialorder %v1856, inf
        %v1942 = vsel %vm1941, %v1856, %v1940
        %vm1943 = vcmp.eq.f32.partialorder %v1856, 0.0
        %v1944 = vand.u32 %v1856, 2147483648
        %v1945 = vsel %vm1943, %v1944, %v1942
        %v1946 = vrsqrt.pop %v1857
        %v1947 = vmul.f32 %v1857, %v1946
        %vm1948 = vcmp.eq.f32.partialorder %v1857, inf
        %v1949 = vsel %vm1948, %v1857, %v1947
        %vm1950 = vcmp.eq.f32.partialorder %v1857, 0.0
        %v1951 = vand.u32 %v1857, 2147483648
        %v1952 = vsel %vm1950, %v1951, %v1949
        %v1953 = vrsqrt.pop %v1858
        %v1954 = vmul.f32 %v1858, %v1953
        %vm1955 = vcmp.eq.f32.partialorder %v1858, inf
        %v1956 = vsel %vm1955, %v1858, %v1954
        %vm1957 = vcmp.eq.f32.partialorder %v1858, 0.0
        %v1958 = vand.u32 %v1858, 2147483648
        %v1959 = vsel %vm1957, %v1958, %v1956
        %v1960 = vrsqrt.pop %v1859
        %v1961 = vmul.f32 %v1859, %v1960
        %vm1962 = vcmp.eq.f32.partialorder %v1859, inf
        %v1963 = vsel %vm1962, %v1859, %v1961
        %vm1964 = vcmp.eq.f32.partialorder %v1859, 0.0
        %v1965 = vand.u32 %v1859, 2147483648
        %v1966 = vsel %vm1964, %v1965, %v1963
        %v1967 = vrsqrt.pop %v1860
        %v1968 = vmul.f32 %v1860, %v1967
        %vm1969 = vcmp.eq.f32.partialorder %v1860, inf
        %v1970 = vsel %vm1969, %v1860, %v1968
        %vm1971 = vcmp.eq.f32.partialorder %v1860, 0.0
        %v1972 = vand.u32 %v1860, 2147483648
        %v1973 = vsel %vm1971, %v1972, %v1970
        %v1974 = vrsqrt.pop %v1861
        %v1975 = vmul.f32 %v1861, %v1974
        %vm1976 = vcmp.eq.f32.partialorder %v1861, inf
        %v1977 = vsel %vm1976, %v1861, %v1975
        %vm1978 = vcmp.eq.f32.partialorder %v1861, 0.0
        %v1979 = vand.u32 %v1861, 2147483648
        %v1980 = vsel %vm1978, %v1979, %v1977
        %vm1981 = vcmask 130048
        %1982 = vst.msk [vmem:[%s198] sm:$0xff] %vm1981, %v1868
        %1983 = vst.msk [vmem:[%s198 + $0x8] sm:$0xff] %vm1981, %v1875
        %1984 = vst.msk [vmem:[%s198 + $0x10] sm:$0xff] %vm1981, %v1882
        %1985 = vst.msk [vmem:[%s198 + $0x18] sm:$0xff] %vm1981, %v1889
        %1986 = vst.msk [vmem:[%s198 + $0x20] sm:$0xff] %vm1981, %v1896
        %1987 = vst.msk [vmem:[%s198 + $0x28] sm:$0xff] %vm1981, %v1903
        %1988 = vst.msk [vmem:[%s198 + $0x30] sm:$0xff] %vm1981, %v1910
        %1989 = vst.msk [vmem:[%s198 + $0x38] sm:$0xff] %vm1981, %v1917
        %1990 = vst.msk [vmem:[%s198 + $0x40] sm:$0xff] %vm1981, %v1924
        %1991 = vst.msk [vmem:[%s198 + $0x48] sm:$0xff] %vm1981, %v1931
        %1992 = vst.msk [vmem:[%s198 + $0x50] sm:$0xff] %vm1981, %v1938
        %1993 = vst.msk [vmem:[%s198 + $0x58] sm:$0xff] %vm1981, %v1945
        %1994 = vst.msk [vmem:[%s198 + $0x60] sm:$0xff] %vm1981, %v1952
        %1995 = vst.msk [vmem:[%s198 + $0x68] sm:$0xff] %vm1981, %v1959
        %1996 = vst.msk [vmem:[%s198 + $0x70] sm:$0xff] %vm1981, %v1966
        %1997 = vst.msk [vmem:[%s198 + $0x78] sm:$0xff] %vm1981, %v1973
        %vm1998 = vcmask 122880
        %1999 = vst.msk [vmem:[%s198 + $0x80] sm:$0x1] %vm1998, %v1980
        %p2000 = scmp.lt.s32.totalorder %s21, 1
        %s2001 = scalar_select %p2000, %s21, 1
        %p2002 = scmp.lt.s32.totalorder %s22, 0
        %s2003 = scalar_select %p2002, %s22, 0
        %s2004 = smul.addr %s2001, 17
        %s2005 = sadd.s32 %s2003, %s2004
        %s2006 = smul.addr %s2005, 8
        %s2007 = scalar_lea.vmem %s2, %s2006
        // Predicated region
        $region37: #{tpu_custom_call.1} parent=27 // pred_check
          %p2008 = pneg %p96
        $region38: #{tpu_custom_call.1} parent=27 // pred_check_branch
          %2010 = sbr.rel (%p2008) target = $region40
        $region39: #{tpu_custom_call.1} parent=27 // pred_region
          _
        $region40: #{tpu_custom_call.1} parent=27 // pred_fallthru
          _
      $region28: #{tpu_custom_call.1} parent=5 // pred_fallthru
        _
      %p2011 = scmp.le.s32.totalorder 2, %s12
      // Predicated region
      $region41: #{tpu_custom_call.1} parent=5 // pred_check
        %p2012 = pneg %p2011
      $region42: #{tpu_custom_call.1} parent=5 // pred_check_branch
        %2014 = sbr.rel (%p2012) target = $region44
      $region43: #{tpu_custom_call.1} parent=5 // pred_region
        %s2015 = ssub.s32 %s12, 2
        // Predicated region
        $region45: #{tpu_custom_call.1} parent=43 // pred_check
          %p2016 = pneg %p102
        $region46: #{tpu_custom_call.1} parent=43 // pred_check_branch
          %2018 = sbr.rel (%p2016) target = $region48
        $region47: #{tpu_custom_call.1} parent=43 // pred_region
          %p2019 = scmp.lt.s32.totalorder %s23, 1
          %s2020 = scalar_select %p2019, %s23, 1
          %p2021 = scmp.lt.s32.totalorder %s24, 0
          %s2022 = scalar_select %p2021, %s24, 0
          %s2023 = smul.addr %s2020, 17
          %s2024 = sadd.s32 %s2022, %s2023
          %s2025 = smul.addr %s2024, 8
          %s2026 = scalar_lea.vmem %s2, %s2025
        $region48: #{tpu_custom_call.1} parent=43 // pred_fallthru
          _
      $region44: #{tpu_custom_call.1} parent=5 // pred_fallthru
        _
    $region6: #{tpu_custom_call.1} parent=1 // loop_footer
      %s16 = sadd.s32 1, %s12
    $region7: #{tpu_custom_call.1} parent=1 // loop_footer_branch
      %11 = sbr.rel target = $region3
    $region8: #{tpu_custom_call.1} parent=1 // loop_exit
      _
    %2027 = vsyncpa [#allocation3], 1
    %s2028 = scalar_lea.sflag [#allocation3], 1
    %2029 = vsyncpa %s2028, 1
    %2030 = vsyncpa [#allocation5], 1

</llo_original>
